<compile_context>
chip_gen: v7x
topology: tpu7x:2x2x1
jax: 0.10.0
libtpu: 0.0.40
codegen_flags: <defaults>
</compile_context>

<pallas_src>
import jax
import jax.numpy as jnp
from jax.experimental import pallas as pl
from jax.experimental.pallas import tpu as pltpu

# CLIF constants (PopSAN defaults used by the NoisySAN example)
V_TH = 0.5
C_DECAY = 0.5
V_DECAY = 0.75

_SUBLANE = 8
_LANE = 128


def _round_up(n, m):
    return ((n + m - 1) // m) * m


def make_fused_kernel(num_layers, T, Bp, out_dims_p):
    """Build the fused Linear+Noisy(ILC)CLIF kernel for a fixed (padded) layer structure.

    Ref layout (positional):
      refs[0]                      : x           (T*Bp, INp)      f32
      refs[1+6*l : 7+6*l]          : w_l (INp_l,Hp_l), b_l (1,Hp_l),
                                     sig_c_l (1,1,Hp_l), sig_v_l (1,1,Hp_l),
                                     eps_c_l (T,Bp,Hp_l), eps_v_l (T,Bp,Hp_l)
      refs[1 + 6*num_layers]       : w_ilc       (Hp_last, Hp_last)
      refs[2 + 6*num_layers]       : out         (T*Bp, Hp_last)
    """

    def kernel(*refs):
        x_ref = refs[0]
        layer_refs = refs[1:1 + 6 * num_layers]
        wilc_ref = refs[1 + 6 * num_layers]
        out_ref = refs[2 + 6 * num_layers]

        x = x_ref[...]                                      # (T*Bp, INp)
        for l in range(num_layers):
            (w_ref, b_ref, sc_ref, sv_ref,
             ec_ref, ev_ref) = layer_refs[6 * l:6 * l + 6]
            H = out_dims_p[l]
            is_last = (l == num_layers - 1)

            # Feed-forward synaptic current for ALL T steps in one MXU matmul,
            # hoisted out of the recurrent loop; bias added once per layer.
            I = jnp.dot(x, w_ref[...],
                        preferred_element_type=jnp.float32) + b_ref[...]

            # Sigma folding in-kernel: one bulk VPU multiply per layer, outside
            # the serial recurrence (previously a separate XLA op in the wrapper
            # that round-tripped a full (T,B,H) array through HBM).
            ec = ec_ref[...] * sc_ref[...]                  # (T, Bp, H)
            ev = ev_ref[...] * sv_ref[...]

            w_ilc = wilc_ref[...] if is_last else None

            c = jnp.zeros((Bp, H), jnp.float32)
            v = jnp.zeros((Bp, H), jnp.float32)
            s = jnp.zeros((Bp, H), jnp.float32)
            spikes = []

            # Statically unrolled, VPU-only CLIF recurrence over the short fixed T.
            # Every per-step tile is an aligned, lane-dense (Bp, H) = (8, 128k) slab.
            for t in range(T):
                i_t = I[t * Bp:(t + 1) * Bp, :]
                if is_last:
                    # Intra-layer lateral connections on previous spikes.
                    # TODO(synk): ILC term placement (current vs. voltage) is
                    # reconstructed from the ILC-SAN paper; verify against the
                    # reference spikingjelly NoisyILCCLIFNode.
                    i_t = i_t + jnp.dot(s, w_ilc,
                                        preferred_element_type=jnp.float32)
                c = C_DECAY * c + i_t + ec[t]               # sigma already folded in
                v = V_DECAY * v * (1.0 - s) + c + ev[t]
                s = (v >= V_TH).astype(jnp.float32)
                spikes.append(s)                            # spikes stay in registers

            stacked = jnp.concatenate(spikes, axis=0)       # (T*Bp, H), aligned tiles
            if is_last:
                out_ref[...] = stacked                      # single unmasked store
            else:
                x = stacked                                 # feeds next layer's matmul

    return kernel


def _full_spec(shape):
    """Full-extent block (loaded into VMEM once; grid has a single step)."""
    nd = len(shape)
    return pl.BlockSpec(shape, lambda i, _n=nd: (0,) * _n)


@jax.jit
def noisy_spike_mlp_forward(in_pop_spikes, params, noises):
    """in_pop_spikes: [T, B, in_pop_dim]  ->  [T, B, act_dim*dec_pop_dim]."""
    T, B, IN = in_pop_spikes.shape
    out_dims = tuple(int(p["w"].shape[1]) for p in params)
    OUT = out_dims[-1]

    # Pad batch to the sublane width and every feature dim to the lane width so
    # all per-step tiles in the kernel's serial recurrence are aligned, unmasked
    # full vregs.  Padded neurons get zero weight/bias/noise -> never spike.
    Bp = _round_up(max(B, 1), _SUBLANE)
    INp = _round_up(IN, _LANE)
    out_dims_p = tuple(_round_up(h, _LANE) for h in out_dims)
    OUTp = out_dims_p[-1]

    x = jnp.pad(in_pop_spikes, ((0, 0), (0, Bp - B), (0, INp - IN)))
    x2d = x.reshape(T * Bp, INp)

    inputs = [x2d]
    in_specs = [_full_spec((T * Bp, INp))]
    fan_ins_p = (INp,) + out_dims_p[:-1]
    flops = 0
    for li, (p, (eps_c, eps_v)) in enumerate(zip(params, noises)):
        fi, fo = int(p["w"].shape[0]), int(p["w"].shape[1])
        fip, fop = fan_ins_p[li], out_dims_p[li]
        w = jnp.pad(p["w"], ((0, fip - fi), (0, fop - fo)))
        b = jnp.pad(p["b"], ((0, 0), (0, fop - fo)))
        sc = jnp.pad(p["sig_c"], ((0, 0), (0, fop - fo))).reshape(1, 1, fop)
        sv = jnp.pad(p["sig_v"], ((0, 0), (0, fop - fo))).reshape(1, 1, fop)
        ec = jnp.pad(eps_c, ((0, 0), (0, Bp - B), (0, fop - fo)))
        ev = jnp.pad(eps_v, ((0, 0), (0, Bp - B), (0, fop - fo)))
        inputs += [w, b, sc, sv, ec, ev]
        in_specs += [_full_spec((fip, fop)), _full_spec((1, fop)),
                     _full_spec((1, 1, fop)), _full_spec((1, 1, fop)),
                     _full_spec((T, Bp, fop)), _full_spec((T, Bp, fop))]
        flops += 2 * T * Bp * fip * fop
    w_ilc = jnp.pad(params[-1]["w_ilc"], ((0, OUTp - OUT), (0, OUTp - OUT)))
    inputs.append(w_ilc)
    in_specs.append(_full_spec((OUTp, OUTp)))
    flops += 2 * T * Bp * OUTp * OUTp                      # serialized ILC matmuls

    bytes_in = sum(int(a.size) * a.dtype.itemsize for a in inputs)
    bytes_out = T * Bp * OUTp * 4
    # Explicit VMEM budget (everything is resident; grid=(1,)).  Never exceeds
    # what fits on v7x's 64 MiB at these shapes; grows linearly with B/H.
    vmem_limit = int(min(max(2 * (bytes_in + bytes_out) + (4 << 20), 16 << 20),
                         64 << 20))

    kernel = make_fused_kernel(len(params), T, Bp, out_dims_p)
    out2d = pl.pallas_call(
        kernel,
        out_shape=jax.ShapeDtypeStruct((T * Bp, OUTp), jnp.float32),
        grid_spec=pltpu.PrefetchScalarGridSpec(
            num_scalar_prefetch=0,
            grid=(1,),
            in_specs=in_specs,
            out_specs=_full_spec((T * Bp, OUTp)),
        ),
        compiler_params=pltpu.CompilerParams(
            dimension_semantics=("arbitrary",),
            vmem_limit_bytes=vmem_limit),
        cost_estimate=pl.CostEstimate(
            flops=int(flops), transcendentals=0,
            bytes_accessed=int(bytes_in + bytes_out)),
    )(*inputs)

    # Free, contiguous un-pad back to the module's (T, B, act_dim*dec_pop_dim).
    return out2d.reshape(T, Bp, OUTp)[:, :B, :OUT]


def colored_noise(key, T, B, N, beta):
    """eps[t] = beta*eps[t-1] + sqrt(1-beta^2)*white[t]  (NoisySAN reset_noise)."""
    white = jax.random.normal(key, (T, B, N), jnp.float32)

    def step(prev, w):
        eps = beta * prev + jnp.sqrt(1.0 - beta ** 2) * w
        return eps, eps

    _, eps = jax.lax.scan(step, jnp.zeros((B, N), jnp.float32), white)
    return eps


def init_params(key, in_pop_dim, hidden_sizes, act_dim, dec_pop_dim, sigma_init):
    """Deterministic parameter init (PyTorch nn.Linear-style uniform bounds)."""
    params = []
    dims = [in_pop_dim] + list(hidden_sizes) + [act_dim * dec_pop_dim]
    for i in range(len(dims) - 1):
        fan_in, fan_out = dims[i], dims[i + 1]
        key, kw, kb = jax.random.split(key, 3)
        bound = 1.0 / jnp.sqrt(fan_in)
        w = jax.random.uniform(kw, (fan_in, fan_out), jnp.float32, -bound, bound)
        b = jax.random.uniform(kb, (1, fan_out), jnp.float32, -bound, bound)
        sig_c = jnp.full((1, fan_out), sigma_init, jnp.float32)
        sig_v = jnp.full((1, fan_out), sigma_init, jnp.float32)
        params.append(dict(w=w, b=b, sig_c=sig_c, sig_v=sig_v))
    # Intra-layer-connection weights: one (P,P) matrix per action, assembled
    # into a block-diagonal (A*P, A*P) matrix so the kernel uses a single matmul.
    key, kilc = jax.random.split(key)
    bound = 1.0 / jnp.sqrt(dec_pop_dim)
    blocks = jax.random.uniform(
        kilc, (act_dim, dec_pop_dim, dec_pop_dim), jnp.float32, -bound, bound)
    w_ilc = jax.scipy.linalg.block_diag(*[blocks[a] for a in range(act_dim)])
    params[-1]["w_ilc"] = w_ilc.astype(jnp.float32)
    return params, key


if __name__ == "__main__":
    # Small, forward-consistent shapes.
    T = 8              # spike_ts
    B = 4              # batch
    in_pop_dim = 32
    hidden_sizes = (32, 32)
    act_dim = 4
    dec_pop_dim = 8
    beta = 0.5
    sigma_init = 0.5

    key = jax.random.PRNGKey(0)
    params, key = init_params(key, in_pop_dim, hidden_sizes,
                              act_dim, dec_pop_dim, sigma_init)

    # Colored noise per noisy neuron layer (2 channels per neuron: current & voltage),
    # sampled deterministically here (plays the role of reset_noise()).
    out_dims = list(hidden_sizes) + [act_dim * dec_pop_dim]
    noises = []
    for n in out_dims:
        key, kc, kv = jax.random.split(key, 3)
        noises.append((colored_noise(kc, T, B, n, beta),
                       colored_noise(kv, T, B, n, beta)))

    # Binary input population spikes.
    key, kx = jax.random.split(key)
    in_pop_spikes = jax.random.bernoulli(
        kx, 0.3, (T, B, in_pop_dim)).astype(jnp.float32)

    out = noisy_spike_mlp_forward(in_pop_spikes, params, noises)
    out = jax.block_until_ready(out)
    assert out.shape == (T, B, act_dim * dec_pop_dim), out.shape
    print("KERNEL_OK")
</pallas_src>

<mosaic_0001>
module attributes {stable_mosaic.version = 11 : i64} {
  func.func @kernel(%arg0: i32, %arg1: memref<64x128xf32, #tpu.memory_space<vmem>>, %arg2: memref<128x128xf32, #tpu.memory_space<vmem>>, %arg3: memref<1x128xf32, #tpu.memory_space<vmem>>, %arg4: memref<1x1x128xf32, #tpu.memory_space<vmem>>, %arg5: memref<1x1x128xf32, #tpu.memory_space<vmem>>, %arg6: memref<8x8x128xf32, #tpu.memory_space<vmem>>, %arg7: memref<8x8x128xf32, #tpu.memory_space<vmem>>, %arg8: memref<128x128xf32, #tpu.memory_space<vmem>>, %arg9: memref<1x128xf32, #tpu.memory_space<vmem>>, %arg10: memref<1x1x128xf32, #tpu.memory_space<vmem>>, %arg11: memref<1x1x128xf32, #tpu.memory_space<vmem>>, %arg12: memref<8x8x128xf32, #tpu.memory_space<vmem>>, %arg13: memref<8x8x128xf32, #tpu.memory_space<vmem>>, %arg14: memref<128x128xf32, #tpu.memory_space<vmem>>, %arg15: memref<1x128xf32, #tpu.memory_space<vmem>>, %arg16: memref<1x1x128xf32, #tpu.memory_space<vmem>>, %arg17: memref<1x1x128xf32, #tpu.memory_space<vmem>>, %arg18: memref<8x8x128xf32, #tpu.memory_space<vmem>>, %arg19: memref<8x8x128xf32, #tpu.memory_space<vmem>>, %arg20: memref<128x128xf32, #tpu.memory_space<vmem>>, %arg21: memref<64x128xf32, #tpu.memory_space<vmem>>) attributes {dimension_semantics = [#tpu.dimension_semantics<arbitrary>], iteration_bounds = array<i64: 1>, scalar_prefetch = 0 : i64, scratch_operands = 0 : i64, tpu.core_type = #tpu.core_type<tc>, window_params = [{pipeline_mode = #tpu.pipeline_mode<synchronous>, transform_indices = @transform_0, window_bounds = array<i64: 64, 128>}, {pipeline_mode = #tpu.pipeline_mode<synchronous>, transform_indices = @transform_1, window_bounds = array<i64: 128, 128>}, {pipeline_mode = #tpu.pipeline_mode<synchronous>, transform_indices = @transform_2, window_bounds = array<i64: 1, 128>}, {pipeline_mode = #tpu.pipeline_mode<synchronous>, transform_indices = @transform_3, window_bounds = array<i64: 1, 1, 128>}, {pipeline_mode = #tpu.pipeline_mode<synchronous>, transform_indices = @transform_4, window_bounds = array<i64: 1, 1, 128>}, {pipeline_mode = #tpu.pipeline_mode<synchronous>, transform_indices = @transform_5, window_bounds = array<i64: 8, 8, 128>}, {pipeline_mode = #tpu.pipeline_mode<synchronous>, transform_indices = @transform_6, window_bounds = array<i64: 8, 8, 128>}, {pipeline_mode = #tpu.pipeline_mode<synchronous>, transform_indices = @transform_7, window_bounds = array<i64: 128, 128>}, {pipeline_mode = #tpu.pipeline_mode<synchronous>, transform_indices = @transform_8, window_bounds = array<i64: 1, 128>}, {pipeline_mode = #tpu.pipeline_mode<synchronous>, transform_indices = @transform_9, window_bounds = array<i64: 1, 1, 128>}, {pipeline_mode = #tpu.pipeline_mode<synchronous>, transform_indices = @transform_10, window_bounds = array<i64: 1, 1, 128>}, {pipeline_mode = #tpu.pipeline_mode<synchronous>, transform_indices = @transform_11, window_bounds = array<i64: 8, 8, 128>}, {pipeline_mode = #tpu.pipeline_mode<synchronous>, transform_indices = @transform_12, window_bounds = array<i64: 8, 8, 128>}, {pipeline_mode = #tpu.pipeline_mode<synchronous>, transform_indices = @transform_13, window_bounds = array<i64: 128, 128>}, {pipeline_mode = #tpu.pipeline_mode<synchronous>, transform_indices = @transform_14, window_bounds = array<i64: 1, 128>}, {pipeline_mode = #tpu.pipeline_mode<synchronous>, transform_indices = @transform_15, window_bounds = array<i64: 1, 1, 128>}, {pipeline_mode = #tpu.pipeline_mode<synchronous>, transform_indices = @transform_16, window_bounds = array<i64: 1, 1, 128>}, {pipeline_mode = #tpu.pipeline_mode<synchronous>, transform_indices = @transform_17, window_bounds = array<i64: 8, 8, 128>}, {pipeline_mode = #tpu.pipeline_mode<synchronous>, transform_indices = @transform_18, window_bounds = array<i64: 8, 8, 128>}, {pipeline_mode = #tpu.pipeline_mode<synchronous>, transform_indices = @transform_19, window_bounds = array<i64: 128, 128>}, {pipeline_mode = #tpu.pipeline_mode<synchronous>, transform_indices = @transform_20, window_bounds = array<i64: 64, 128>}]} {
    %c0 = arith.constant 0 : index
    %c0_0 = arith.constant 0 : index
    %0 = vector.load %arg1[%c0, %c0_0] : memref<64x128xf32, #tpu.memory_space<vmem>>, vector<64x128xf32>
    %c0_1 = arith.constant 0 : index
    %c0_2 = arith.constant 0 : index
    %1 = vector.load %arg2[%c0_1, %c0_2] : memref<128x128xf32, #tpu.memory_space<vmem>>, vector<128x128xf32>
    %cst = arith.constant dense<0.000000e+00> : vector<64x128xf32>
    %2 = tpu.matmul %0, %1, %cst {dimension_numbers = #tpu.dot_dimension_numbers<[1], [0], [0], [1], [0, 0, 1, 1], [], []>} : vector<64x128xf32>, vector<128x128xf32>, vector<64x128xf32> -> vector<64x128xf32>
    %c0_3 = arith.constant 0 : index
    %c0_4 = arith.constant 0 : index
    %3 = vector.load %arg3[%c0_3, %c0_4] : memref<1x128xf32, #tpu.memory_space<vmem>>, vector<1x128xf32>
    %4 = vector.broadcast %3 : vector<1x128xf32> to vector<64x128xf32>
    %5 = arith.addf %2, %4 : vector<64x128xf32>
    %c0_5 = arith.constant 0 : index
    %c0_6 = arith.constant 0 : index
    %c0_7 = arith.constant 0 : index
    %6 = vector.load %arg6[%c0_5, %c0_6, %c0_7] : memref<8x8x128xf32, #tpu.memory_space<vmem>>, vector<8x8x128xf32>
    %c0_8 = arith.constant 0 : index
    %c0_9 = arith.constant 0 : index
    %c0_10 = arith.constant 0 : index
    %7 = vector.load %arg4[%c0_8, %c0_9, %c0_10] : memref<1x1x128xf32, #tpu.memory_space<vmem>>, vector<1x1x128xf32>
    %8 = vector.broadcast %7 : vector<1x1x128xf32> to vector<8x8x128xf32>
    %9 = arith.mulf %6, %8 : vector<8x8x128xf32>
    %c0_11 = arith.constant 0 : index
    %c0_12 = arith.constant 0 : index
    %c0_13 = arith.constant 0 : index
    %10 = vector.load %arg7[%c0_11, %c0_12, %c0_13] : memref<8x8x128xf32, #tpu.memory_space<vmem>>, vector<8x8x128xf32>
    %c0_14 = arith.constant 0 : index
    %c0_15 = arith.constant 0 : index
    %c0_16 = arith.constant 0 : index
    %11 = vector.load %arg5[%c0_14, %c0_15, %c0_16] : memref<1x1x128xf32, #tpu.memory_space<vmem>>, vector<1x1x128xf32>
    %12 = vector.broadcast %11 : vector<1x1x128xf32> to vector<8x8x128xf32>
    %13 = arith.mulf %10, %12 : vector<8x8x128xf32>
    %cst_17 = arith.constant 0.000000e+00 : f32
    %14 = vector.broadcast %cst_17 : f32 to vector<8x128xf32>
    %cst_18 = arith.constant 0.000000e+00 : f32
    %15 = vector.broadcast %cst_18 : f32 to vector<8x128xf32>
    %cst_19 = arith.constant 0.000000e+00 : f32
    %16 = vector.broadcast %cst_19 : f32 to vector<8x128xf32>
    %17 = vector.extract_strided_slice %5 {offsets = [0, 0], sizes = [8, 128], strides = [1, 1]} : vector<64x128xf32> to vector<8x128xf32>
    %cst_20 = arith.constant 5.000000e-01 : f32
    %18 = vector.broadcast %cst_20 : f32 to vector<8x128xf32>
    %19 = arith.mulf %18, %14 : vector<8x128xf32>
    %20 = arith.addf %19, %17 : vector<8x128xf32>
    %21 = vector.extract_strided_slice %9 {offsets = [0, 0, 0], sizes = [1, 8, 128], strides = [1, 1, 1]} : vector<8x8x128xf32> to vector<1x8x128xf32>
    %22 = vector.shape_cast %21 : vector<1x8x128xf32> to vector<8x128xf32>
    %23 = arith.addf %20, %22 : vector<8x128xf32>
    %cst_21 = arith.constant 7.500000e-01 : f32
    %24 = vector.broadcast %cst_21 : f32 to vector<8x128xf32>
    %25 = arith.mulf %24, %15 : vector<8x128xf32>
    %cst_22 = arith.constant 1.000000e+00 : f32
    %26 = vector.broadcast %cst_22 : f32 to vector<8x128xf32>
    %27 = arith.subf %26, %16 : vector<8x128xf32>
    %28 = arith.mulf %25, %27 : vector<8x128xf32>
    %29 = arith.addf %28, %23 : vector<8x128xf32>
    %30 = vector.extract_strided_slice %13 {offsets = [0, 0, 0], sizes = [1, 8, 128], strides = [1, 1, 1]} : vector<8x8x128xf32> to vector<1x8x128xf32>
    %31 = vector.shape_cast %30 : vector<1x8x128xf32> to vector<8x128xf32>
    %32 = arith.addf %29, %31 : vector<8x128xf32>
    %cst_23 = arith.constant 5.000000e-01 : f32
    %33 = vector.broadcast %cst_23 : f32 to vector<8x128xf32>
    %34 = arith.cmpf oge, %32, %33 : vector<8x128xf32>
    %35 = arith.extui %34 : vector<8x128xi1> to vector<8x128xi32>
    %36 = arith.sitofp %35 : vector<8x128xi32> to vector<8x128xf32>
    %37 = vector.extract_strided_slice %5 {offsets = [8, 0], sizes = [8, 128], strides = [1, 1]} : vector<64x128xf32> to vector<8x128xf32>
    %cst_24 = arith.constant 5.000000e-01 : f32
    %38 = vector.broadcast %cst_24 : f32 to vector<8x128xf32>
    %39 = arith.mulf %38, %23 : vector<8x128xf32>
    %40 = arith.addf %39, %37 : vector<8x128xf32>
    %41 = vector.extract_strided_slice %9 {offsets = [1, 0, 0], sizes = [1, 8, 128], strides = [1, 1, 1]} : vector<8x8x128xf32> to vector<1x8x128xf32>
    %42 = vector.shape_cast %41 : vector<1x8x128xf32> to vector<8x128xf32>
    %43 = arith.addf %40, %42 : vector<8x128xf32>
    %cst_25 = arith.constant 7.500000e-01 : f32
    %44 = vector.broadcast %cst_25 : f32 to vector<8x128xf32>
    %45 = arith.mulf %44, %32 : vector<8x128xf32>
    %cst_26 = arith.constant 1.000000e+00 : f32
    %46 = vector.broadcast %cst_26 : f32 to vector<8x128xf32>
    %47 = arith.subf %46, %36 : vector<8x128xf32>
    %48 = arith.mulf %45, %47 : vector<8x128xf32>
    %49 = arith.addf %48, %43 : vector<8x128xf32>
    %50 = vector.extract_strided_slice %13 {offsets = [1, 0, 0], sizes = [1, 8, 128], strides = [1, 1, 1]} : vector<8x8x128xf32> to vector<1x8x128xf32>
    %51 = vector.shape_cast %50 : vector<1x8x128xf32> to vector<8x128xf32>
    %52 = arith.addf %49, %51 : vector<8x128xf32>
    %cst_27 = arith.constant 5.000000e-01 : f32
    %53 = vector.broadcast %cst_27 : f32 to vector<8x128xf32>
    %54 = arith.cmpf oge, %52, %53 : vector<8x128xf32>
    %55 = arith.extui %54 : vector<8x128xi1> to vector<8x128xi32>
    %56 = arith.sitofp %55 : vector<8x128xi32> to vector<8x128xf32>
    %57 = vector.extract_strided_slice %5 {offsets = [16, 0], sizes = [8, 128], strides = [1, 1]} : vector<64x128xf32> to vector<8x128xf32>
    %cst_28 = arith.constant 5.000000e-01 : f32
    %58 = vector.broadcast %cst_28 : f32 to vector<8x128xf32>
    %59 = arith.mulf %58, %43 : vector<8x128xf32>
    %60 = arith.addf %59, %57 : vector<8x128xf32>
    %61 = vector.extract_strided_slice %9 {offsets = [2, 0, 0], sizes = [1, 8, 128], strides = [1, 1, 1]} : vector<8x8x128xf32> to vector<1x8x128xf32>
    %62 = vector.shape_cast %61 : vector<1x8x128xf32> to vector<8x128xf32>
    %63 = arith.addf %60, %62 : vector<8x128xf32>
    %cst_29 = arith.constant 7.500000e-01 : f32
    %64 = vector.broadcast %cst_29 : f32 to vector<8x128xf32>
    %65 = arith.mulf %64, %52 : vector<8x128xf32>
    %cst_30 = arith.constant 1.000000e+00 : f32
    %66 = vector.broadcast %cst_30 : f32 to vector<8x128xf32>
    %67 = arith.subf %66, %56 : vector<8x128xf32>
    %68 = arith.mulf %65, %67 : vector<8x128xf32>
    %69 = arith.addf %68, %63 : vector<8x128xf32>
    %70 = vector.extract_strided_slice %13 {offsets = [2, 0, 0], sizes = [1, 8, 128], strides = [1, 1, 1]} : vector<8x8x128xf32> to vector<1x8x128xf32>
    %71 = vector.shape_cast %70 : vector<1x8x128xf32> to vector<8x128xf32>
    %72 = arith.addf %69, %71 : vector<8x128xf32>
    %cst_31 = arith.constant 5.000000e-01 : f32
    %73 = vector.broadcast %cst_31 : f32 to vector<8x128xf32>
    %74 = arith.cmpf oge, %72, %73 : vector<8x128xf32>
    %75 = arith.extui %74 : vector<8x128xi1> to vector<8x128xi32>
    %76 = arith.sitofp %75 : vector<8x128xi32> to vector<8x128xf32>
    %77 = vector.extract_strided_slice %5 {offsets = [24, 0], sizes = [8, 128], strides = [1, 1]} : vector<64x128xf32> to vector<8x128xf32>
    %cst_32 = arith.constant 5.000000e-01 : f32
    %78 = vector.broadcast %cst_32 : f32 to vector<8x128xf32>
    %79 = arith.mulf %78, %63 : vector<8x128xf32>
    %80 = arith.addf %79, %77 : vector<8x128xf32>
    %81 = vector.extract_strided_slice %9 {offsets = [3, 0, 0], sizes = [1, 8, 128], strides = [1, 1, 1]} : vector<8x8x128xf32> to vector<1x8x128xf32>
    %82 = vector.shape_cast %81 : vector<1x8x128xf32> to vector<8x128xf32>
    %83 = arith.addf %80, %82 : vector<8x128xf32>
    %cst_33 = arith.constant 7.500000e-01 : f32
    %84 = vector.broadcast %cst_33 : f32 to vector<8x128xf32>
    %85 = arith.mulf %84, %72 : vector<8x128xf32>
    %cst_34 = arith.constant 1.000000e+00 : f32
    %86 = vector.broadcast %cst_34 : f32 to vector<8x128xf32>
    %87 = arith.subf %86, %76 : vector<8x128xf32>
    %88 = arith.mulf %85, %87 : vector<8x128xf32>
    %89 = arith.addf %88, %83 : vector<8x128xf32>
    %90 = vector.extract_strided_slice %13 {offsets = [3, 0, 0], sizes = [1, 8, 128], strides = [1, 1, 1]} : vector<8x8x128xf32> to vector<1x8x128xf32>
    %91 = vector.shape_cast %90 : vector<1x8x128xf32> to vector<8x128xf32>
    %92 = arith.addf %89, %91 : vector<8x128xf32>
    %cst_35 = arith.constant 5.000000e-01 : f32
    %93 = vector.broadcast %cst_35 : f32 to vector<8x128xf32>
    %94 = arith.cmpf oge, %92, %93 : vector<8x128xf32>
    %95 = arith.extui %94 : vector<8x128xi1> to vector<8x128xi32>
    %96 = arith.sitofp %95 : vector<8x128xi32> to vector<8x128xf32>
    %97 = vector.extract_strided_slice %5 {offsets = [32, 0], sizes = [8, 128], strides = [1, 1]} : vector<64x128xf32> to vector<8x128xf32>
    %cst_36 = arith.constant 5.000000e-01 : f32
    %98 = vector.broadcast %cst_36 : f32 to vector<8x128xf32>
    %99 = arith.mulf %98, %83 : vector<8x128xf32>
    %100 = arith.addf %99, %97 : vector<8x128xf32>
    %101 = vector.extract_strided_slice %9 {offsets = [4, 0, 0], sizes = [1, 8, 128], strides = [1, 1, 1]} : vector<8x8x128xf32> to vector<1x8x128xf32>
    %102 = vector.shape_cast %101 : vector<1x8x128xf32> to vector<8x128xf32>
    %103 = arith.addf %100, %102 : vector<8x128xf32>
    %cst_37 = arith.constant 7.500000e-01 : f32
    %104 = vector.broadcast %cst_37 : f32 to vector<8x128xf32>
    %105 = arith.mulf %104, %92 : vector<8x128xf32>
    %cst_38 = arith.constant 1.000000e+00 : f32
    %106 = vector.broadcast %cst_38 : f32 to vector<8x128xf32>
    %107 = arith.subf %106, %96 : vector<8x128xf32>
    %108 = arith.mulf %105, %107 : vector<8x128xf32>
    %109 = arith.addf %108, %103 : vector<8x128xf32>
    %110 = vector.extract_strided_slice %13 {offsets = [4, 0, 0], sizes = [1, 8, 128], strides = [1, 1, 1]} : vector<8x8x128xf32> to vector<1x8x128xf32>
    %111 = vector.shape_cast %110 : vector<1x8x128xf32> to vector<8x128xf32>
    %112 = arith.addf %109, %111 : vector<8x128xf32>
    %cst_39 = arith.constant 5.000000e-01 : f32
    %113 = vector.broadcast %cst_39 : f32 to vector<8x128xf32>
    %114 = arith.cmpf oge, %112, %113 : vector<8x128xf32>
    %115 = arith.extui %114 : vector<8x128xi1> to vector<8x128xi32>
    %116 = arith.sitofp %115 : vector<8x128xi32> to vector<8x128xf32>
    %117 = vector.extract_strided_slice %5 {offsets = [40, 0], sizes = [8, 128], strides = [1, 1]} : vector<64x128xf32> to vector<8x128xf32>
    %cst_40 = arith.constant 5.000000e-01 : f32
    %118 = vector.broadcast %cst_40 : f32 to vector<8x128xf32>
    %119 = arith.mulf %118, %103 : vector<8x128xf32>
    %120 = arith.addf %119, %117 : vector<8x128xf32>
    %121 = vector.extract_strided_slice %9 {offsets = [5, 0, 0], sizes = [1, 8, 128], strides = [1, 1, 1]} : vector<8x8x128xf32> to vector<1x8x128xf32>
    %122 = vector.shape_cast %121 : vector<1x8x128xf32> to vector<8x128xf32>
    %123 = arith.addf %120, %122 : vector<8x128xf32>
    %cst_41 = arith.constant 7.500000e-01 : f32
    %124 = vector.broadcast %cst_41 : f32 to vector<8x128xf32>
    %125 = arith.mulf %124, %112 : vector<8x128xf32>
    %cst_42 = arith.constant 1.000000e+00 : f32
    %126 = vector.broadcast %cst_42 : f32 to vector<8x128xf32>
    %127 = arith.subf %126, %116 : vector<8x128xf32>
    %128 = arith.mulf %125, %127 : vector<8x128xf32>
    %129 = arith.addf %128, %123 : vector<8x128xf32>
    %130 = vector.extract_strided_slice %13 {offsets = [5, 0, 0], sizes = [1, 8, 128], strides = [1, 1, 1]} : vector<8x8x128xf32> to vector<1x8x128xf32>
    %131 = vector.shape_cast %130 : vector<1x8x128xf32> to vector<8x128xf32>
    %132 = arith.addf %129, %131 : vector<8x128xf32>
    %cst_43 = arith.constant 5.000000e-01 : f32
    %133 = vector.broadcast %cst_43 : f32 to vector<8x128xf32>
    %134 = arith.cmpf oge, %132, %133 : vector<8x128xf32>
    %135 = arith.extui %134 : vector<8x128xi1> to vector<8x128xi32>
    %136 = arith.sitofp %135 : vector<8x128xi32> to vector<8x128xf32>
    %137 = vector.extract_strided_slice %5 {offsets = [48, 0], sizes = [8, 128], strides = [1, 1]} : vector<64x128xf32> to vector<8x128xf32>
    %cst_44 = arith.constant 5.000000e-01 : f32
    %138 = vector.broadcast %cst_44 : f32 to vector<8x128xf32>
    %139 = arith.mulf %138, %123 : vector<8x128xf32>
    %140 = arith.addf %139, %137 : vector<8x128xf32>
    %141 = vector.extract_strided_slice %9 {offsets = [6, 0, 0], sizes = [1, 8, 128], strides = [1, 1, 1]} : vector<8x8x128xf32> to vector<1x8x128xf32>
    %142 = vector.shape_cast %141 : vector<1x8x128xf32> to vector<8x128xf32>
    %143 = arith.addf %140, %142 : vector<8x128xf32>
    %cst_45 = arith.constant 7.500000e-01 : f32
    %144 = vector.broadcast %cst_45 : f32 to vector<8x128xf32>
    %145 = arith.mulf %144, %132 : vector<8x128xf32>
    %cst_46 = arith.constant 1.000000e+00 : f32
    %146 = vector.broadcast %cst_46 : f32 to vector<8x128xf32>
    %147 = arith.subf %146, %136 : vector<8x128xf32>
    %148 = arith.mulf %145, %147 : vector<8x128xf32>
    %149 = arith.addf %148, %143 : vector<8x128xf32>
    %150 = vector.extract_strided_slice %13 {offsets = [6, 0, 0], sizes = [1, 8, 128], strides = [1, 1, 1]} : vector<8x8x128xf32> to vector<1x8x128xf32>
    %151 = vector.shape_cast %150 : vector<1x8x128xf32> to vector<8x128xf32>
    %152 = arith.addf %149, %151 : vector<8x128xf32>
    %cst_47 = arith.constant 5.000000e-01 : f32
    %153 = vector.broadcast %cst_47 : f32 to vector<8x128xf32>
    %154 = arith.cmpf oge, %152, %153 : vector<8x128xf32>
    %155 = arith.extui %154 : vector<8x128xi1> to vector<8x128xi32>
    %156 = arith.sitofp %155 : vector<8x128xi32> to vector<8x128xf32>
    %157 = vector.extract_strided_slice %5 {offsets = [56, 0], sizes = [8, 128], strides = [1, 1]} : vector<64x128xf32> to vector<8x128xf32>
    %cst_48 = arith.constant 5.000000e-01 : f32
    %158 = vector.broadcast %cst_48 : f32 to vector<8x128xf32>
    %159 = arith.mulf %158, %143 : vector<8x128xf32>
    %160 = arith.addf %159, %157 : vector<8x128xf32>
    %161 = vector.extract_strided_slice %9 {offsets = [7, 0, 0], sizes = [1, 8, 128], strides = [1, 1, 1]} : vector<8x8x128xf32> to vector<1x8x128xf32>
    %162 = vector.shape_cast %161 : vector<1x8x128xf32> to vector<8x128xf32>
    %163 = arith.addf %160, %162 : vector<8x128xf32>
    %cst_49 = arith.constant 7.500000e-01 : f32
    %164 = vector.broadcast %cst_49 : f32 to vector<8x128xf32>
    %165 = arith.mulf %164, %152 : vector<8x128xf32>
    %cst_50 = arith.constant 1.000000e+00 : f32
    %166 = vector.broadcast %cst_50 : f32 to vector<8x128xf32>
    %167 = arith.subf %166, %156 : vector<8x128xf32>
    %168 = arith.mulf %165, %167 : vector<8x128xf32>
    %169 = arith.addf %168, %163 : vector<8x128xf32>
    %170 = vector.extract_strided_slice %13 {offsets = [7, 0, 0], sizes = [1, 8, 128], strides = [1, 1, 1]} : vector<8x8x128xf32> to vector<1x8x128xf32>
    %171 = vector.shape_cast %170 : vector<1x8x128xf32> to vector<8x128xf32>
    %172 = arith.addf %169, %171 : vector<8x128xf32>
    %cst_51 = arith.constant 5.000000e-01 : f32
    %173 = vector.broadcast %cst_51 : f32 to vector<8x128xf32>
    %174 = arith.cmpf oge, %172, %173 : vector<8x128xf32>
    %175 = arith.extui %174 : vector<8x128xi1> to vector<8x128xi32>
    %176 = arith.sitofp %175 : vector<8x128xi32> to vector<8x128xf32>
    %177 = tpu.concatenate %36, %56, %76, %96, %116, %136, %156, %176 in 0 : vector<8x128xf32>, vector<8x128xf32>, vector<8x128xf32>, vector<8x128xf32>, vector<8x128xf32>, vector<8x128xf32>, vector<8x128xf32>, vector<8x128xf32> -> vector<64x128xf32>
    %c0_52 = arith.constant 0 : index
    %c0_53 = arith.constant 0 : index
    %178 = vector.load %arg8[%c0_52, %c0_53] : memref<128x128xf32, #tpu.memory_space<vmem>>, vector<128x128xf32>
    %cst_54 = arith.constant dense<0.000000e+00> : vector<64x128xf32>
    %179 = tpu.matmul %177, %178, %cst_54 {dimension_numbers = #tpu.dot_dimension_numbers<[1], [0], [0], [1], [0, 0, 1, 1], [], []>} : vector<64x128xf32>, vector<128x128xf32>, vector<64x128xf32> -> vector<64x128xf32>
    %c0_55 = arith.constant 0 : index
    %c0_56 = arith.constant 0 : index
    %180 = vector.load %arg9[%c0_55, %c0_56] : memref<1x128xf32, #tpu.memory_space<vmem>>, vector<1x128xf32>
    %181 = vector.broadcast %180 : vector<1x128xf32> to vector<64x128xf32>
    %182 = arith.addf %179, %181 : vector<64x128xf32>
    %c0_57 = arith.constant 0 : index
    %c0_58 = arith.constant 0 : index
    %c0_59 = arith.constant 0 : index
    %183 = vector.load %arg12[%c0_57, %c0_58, %c0_59] : memref<8x8x128xf32, #tpu.memory_space<vmem>>, vector<8x8x128xf32>
    %c0_60 = arith.constant 0 : index
    %c0_61 = arith.constant 0 : index
    %c0_62 = arith.constant 0 : index
    %184 = vector.load %arg10[%c0_60, %c0_61, %c0_62] : memref<1x1x128xf32, #tpu.memory_space<vmem>>, vector<1x1x128xf32>
    %185 = vector.broadcast %184 : vector<1x1x128xf32> to vector<8x8x128xf32>
    %186 = arith.mulf %183, %185 : vector<8x8x128xf32>
    %c0_63 = arith.constant 0 : index
    %c0_64 = arith.constant 0 : index
    %c0_65 = arith.constant 0 : index
    %187 = vector.load %arg13[%c0_63, %c0_64, %c0_65] : memref<8x8x128xf32, #tpu.memory_space<vmem>>, vector<8x8x128xf32>
    %c0_66 = arith.constant 0 : index
    %c0_67 = arith.constant 0 : index
    %c0_68 = arith.constant 0 : index
    %188 = vector.load %arg11[%c0_66, %c0_67, %c0_68] : memref<1x1x128xf32, #tpu.memory_space<vmem>>, vector<1x1x128xf32>
    %189 = vector.broadcast %188 : vector<1x1x128xf32> to vector<8x8x128xf32>
    %190 = arith.mulf %187, %189 : vector<8x8x128xf32>
    %cst_69 = arith.constant 0.000000e+00 : f32
    %191 = vector.broadcast %cst_69 : f32 to vector<8x128xf32>
    %cst_70 = arith.constant 0.000000e+00 : f32
    %192 = vector.broadcast %cst_70 : f32 to vector<8x128xf32>
    %cst_71 = arith.constant 0.000000e+00 : f32
    %193 = vector.broadcast %cst_71 : f32 to vector<8x128xf32>
    %194 = vector.extract_strided_slice %182 {offsets = [0, 0], sizes = [8, 128], strides = [1, 1]} : vector<64x128xf32> to vector<8x128xf32>
    %cst_72 = arith.constant 5.000000e-01 : f32
    %195 = vector.broadcast %cst_72 : f32 to vector<8x128xf32>
    %196 = arith.mulf %195, %191 : vector<8x128xf32>
    %197 = arith.addf %196, %194 : vector<8x128xf32>
    %198 = vector.extract_strided_slice %186 {offsets = [0, 0, 0], sizes = [1, 8, 128], strides = [1, 1, 1]} : vector<8x8x128xf32> to vector<1x8x128xf32>
    %199 = vector.shape_cast %198 : vector<1x8x128xf32> to vector<8x128xf32>
    %200 = arith.addf %197, %199 : vector<8x128xf32>
    %cst_73 = arith.constant 7.500000e-01 : f32
    %201 = vector.broadcast %cst_73 : f32 to vector<8x128xf32>
    %202 = arith.mulf %201, %192 : vector<8x128xf32>
    %cst_74 = arith.constant 1.000000e+00 : f32
    %203 = vector.broadcast %cst_74 : f32 to vector<8x128xf32>
    %204 = arith.subf %203, %193 : vector<8x128xf32>
    %205 = arith.mulf %202, %204 : vector<8x128xf32>
    %206 = arith.addf %205, %200 : vector<8x128xf32>
    %207 = vector.extract_strided_slice %190 {offsets = [0, 0, 0], sizes = [1, 8, 128], strides = [1, 1, 1]} : vector<8x8x128xf32> to vector<1x8x128xf32>
    %208 = vector.shape_cast %207 : vector<1x8x128xf32> to vector<8x128xf32>
    %209 = arith.addf %206, %208 : vector<8x128xf32>
    %cst_75 = arith.constant 5.000000e-01 : f32
    %210 = vector.broadcast %cst_75 : f32 to vector<8x128xf32>
    %211 = arith.cmpf oge, %209, %210 : vector<8x128xf32>
    %212 = arith.extui %211 : vector<8x128xi1> to vector<8x128xi32>
    %213 = arith.sitofp %212 : vector<8x128xi32> to vector<8x128xf32>
    %214 = vector.extract_strided_slice %182 {offsets = [8, 0], sizes = [8, 128], strides = [1, 1]} : vector<64x128xf32> to vector<8x128xf32>
    %cst_76 = arith.constant 5.000000e-01 : f32
    %215 = vector.broadcast %cst_76 : f32 to vector<8x128xf32>
    %216 = arith.mulf %215, %200 : vector<8x128xf32>
    %217 = arith.addf %216, %214 : vector<8x128xf32>
    %218 = vector.extract_strided_slice %186 {offsets = [1, 0, 0], sizes = [1, 8, 128], strides = [1, 1, 1]} : vector<8x8x128xf32> to vector<1x8x128xf32>
    %219 = vector.shape_cast %218 : vector<1x8x128xf32> to vector<8x128xf32>
    %220 = arith.addf %217, %219 : vector<8x128xf32>
    %cst_77 = arith.constant 7.500000e-01 : f32
    %221 = vector.broadcast %cst_77 : f32 to vector<8x128xf32>
    %222 = arith.mulf %221, %209 : vector<8x128xf32>
    %cst_78 = arith.constant 1.000000e+00 : f32
    %223 = vector.broadcast %cst_78 : f32 to vector<8x128xf32>
    %224 = arith.subf %223, %213 : vector<8x128xf32>
    %225 = arith.mulf %222, %224 : vector<8x128xf32>
    %226 = arith.addf %225, %220 : vector<8x128xf32>
    %227 = vector.extract_strided_slice %190 {offsets = [1, 0, 0], sizes = [1, 8, 128], strides = [1, 1, 1]} : vector<8x8x128xf32> to vector<1x8x128xf32>
    %228 = vector.shape_cast %227 : vector<1x8x128xf32> to vector<8x128xf32>
    %229 = arith.addf %226, %228 : vector<8x128xf32>
    %cst_79 = arith.constant 5.000000e-01 : f32
    %230 = vector.broadcast %cst_79 : f32 to vector<8x128xf32>
    %231 = arith.cmpf oge, %229, %230 : vector<8x128xf32>
    %232 = arith.extui %231 : vector<8x128xi1> to vector<8x128xi32>
    %233 = arith.sitofp %232 : vector<8x128xi32> to vector<8x128xf32>
    %234 = vector.extract_strided_slice %182 {offsets = [16, 0], sizes = [8, 128], strides = [1, 1]} : vector<64x128xf32> to vector<8x128xf32>
    %cst_80 = arith.constant 5.000000e-01 : f32
    %235 = vector.broadcast %cst_80 : f32 to vector<8x128xf32>
    %236 = arith.mulf %235, %220 : vector<8x128xf32>
    %237 = arith.addf %236, %234 : vector<8x128xf32>
    %238 = vector.extract_strided_slice %186 {offsets = [2, 0, 0], sizes = [1, 8, 128], strides = [1, 1, 1]} : vector<8x8x128xf32> to vector<1x8x128xf32>
    %239 = vector.shape_cast %238 : vector<1x8x128xf32> to vector<8x128xf32>
    %240 = arith.addf %237, %239 : vector<8x128xf32>
    %cst_81 = arith.constant 7.500000e-01 : f32
    %241 = vector.broadcast %cst_81 : f32 to vector<8x128xf32>
    %242 = arith.mulf %241, %229 : vector<8x128xf32>
    %cst_82 = arith.constant 1.000000e+00 : f32
    %243 = vector.broadcast %cst_82 : f32 to vector<8x128xf32>
    %244 = arith.subf %243, %233 : vector<8x128xf32>
    %245 = arith.mulf %242, %244 : vector<8x128xf32>
    %246 = arith.addf %245, %240 : vector<8x128xf32>
    %247 = vector.extract_strided_slice %190 {offsets = [2, 0, 0], sizes = [1, 8, 128], strides = [1, 1, 1]} : vector<8x8x128xf32> to vector<1x8x128xf32>
    %248 = vector.shape_cast %247 : vector<1x8x128xf32> to vector<8x128xf32>
    %249 = arith.addf %246, %248 : vector<8x128xf32>
    %cst_83 = arith.constant 5.000000e-01 : f32
    %250 = vector.broadcast %cst_83 : f32 to vector<8x128xf32>
    %251 = arith.cmpf oge, %249, %250 : vector<8x128xf32>
    %252 = arith.extui %251 : vector<8x128xi1> to vector<8x128xi32>
    %253 = arith.sitofp %252 : vector<8x128xi32> to vector<8x128xf32>
    %254 = vector.extract_strided_slice %182 {offsets = [24, 0], sizes = [8, 128], strides = [1, 1]} : vector<64x128xf32> to vector<8x128xf32>
    %cst_84 = arith.constant 5.000000e-01 : f32
    %255 = vector.broadcast %cst_84 : f32 to vector<8x128xf32>
    %256 = arith.mulf %255, %240 : vector<8x128xf32>
    %257 = arith.addf %256, %254 : vector<8x128xf32>
    %258 = vector.extract_strided_slice %186 {offsets = [3, 0, 0], sizes = [1, 8, 128], strides = [1, 1, 1]} : vector<8x8x128xf32> to vector<1x8x128xf32>
    %259 = vector.shape_cast %258 : vector<1x8x128xf32> to vector<8x128xf32>
    %260 = arith.addf %257, %259 : vector<8x128xf32>
    %cst_85 = arith.constant 7.500000e-01 : f32
    %261 = vector.broadcast %cst_85 : f32 to vector<8x128xf32>
    %262 = arith.mulf %261, %249 : vector<8x128xf32>
    %cst_86 = arith.constant 1.000000e+00 : f32
    %263 = vector.broadcast %cst_86 : f32 to vector<8x128xf32>
    %264 = arith.subf %263, %253 : vector<8x128xf32>
    %265 = arith.mulf %262, %264 : vector<8x128xf32>
    %266 = arith.addf %265, %260 : vector<8x128xf32>
    %267 = vector.extract_strided_slice %190 {offsets = [3, 0, 0], sizes = [1, 8, 128], strides = [1, 1, 1]} : vector<8x8x128xf32> to vector<1x8x128xf32>
    %268 = vector.shape_cast %267 : vector<1x8x128xf32> to vector<8x128xf32>
    %269 = arith.addf %266, %268 : vector<8x128xf32>
    %cst_87 = arith.constant 5.000000e-01 : f32
    %270 = vector.broadcast %cst_87 : f32 to vector<8x128xf32>
    %271 = arith.cmpf oge, %269, %270 : vector<8x128xf32>
    %272 = arith.extui %271 : vector<8x128xi1> to vector<8x128xi32>
    %273 = arith.sitofp %272 : vector<8x128xi32> to vector<8x128xf32>
    %274 = vector.extract_strided_slice %182 {offsets = [32, 0], sizes = [8, 128], strides = [1, 1]} : vector<64x128xf32> to vector<8x128xf32>
    %cst_88 = arith.constant 5.000000e-01 : f32
    %275 = vector.broadcast %cst_88 : f32 to vector<8x128xf32>
    %276 = arith.mulf %275, %260 : vector<8x128xf32>
    %277 = arith.addf %276, %274 : vector<8x128xf32>
    %278 = vector.extract_strided_slice %186 {offsets = [4, 0, 0], sizes = [1, 8, 128], strides = [1, 1, 1]} : vector<8x8x128xf32> to vector<1x8x128xf32>
    %279 = vector.shape_cast %278 : vector<1x8x128xf32> to vector<8x128xf32>
    %280 = arith.addf %277, %279 : vector<8x128xf32>
    %cst_89 = arith.constant 7.500000e-01 : f32
    %281 = vector.broadcast %cst_89 : f32 to vector<8x128xf32>
    %282 = arith.mulf %281, %269 : vector<8x128xf32>
    %cst_90 = arith.constant 1.000000e+00 : f32
    %283 = vector.broadcast %cst_90 : f32 to vector<8x128xf32>
    %284 = arith.subf %283, %273 : vector<8x128xf32>
    %285 = arith.mulf %282, %284 : vector<8x128xf32>
    %286 = arith.addf %285, %280 : vector<8x128xf32>
    %287 = vector.extract_strided_slice %190 {offsets = [4, 0, 0], sizes = [1, 8, 128], strides = [1, 1, 1]} : vector<8x8x128xf32> to vector<1x8x128xf32>
    %288 = vector.shape_cast %287 : vector<1x8x128xf32> to vector<8x128xf32>
    %289 = arith.addf %286, %288 : vector<8x128xf32>
    %cst_91 = arith.constant 5.000000e-01 : f32
    %290 = vector.broadcast %cst_91 : f32 to vector<8x128xf32>
    %291 = arith.cmpf oge, %289, %290 : vector<8x128xf32>
    %292 = arith.extui %291 : vector<8x128xi1> to vector<8x128xi32>
    %293 = arith.sitofp %292 : vector<8x128xi32> to vector<8x128xf32>
    %294 = vector.extract_strided_slice %182 {offsets = [40, 0], sizes = [8, 128], strides = [1, 1]} : vector<64x128xf32> to vector<8x128xf32>
    %cst_92 = arith.constant 5.000000e-01 : f32
    %295 = vector.broadcast %cst_92 : f32 to vector<8x128xf32>
    %296 = arith.mulf %295, %280 : vector<8x128xf32>
    %297 = arith.addf %296, %294 : vector<8x128xf32>
    %298 = vector.extract_strided_slice %186 {offsets = [5, 0, 0], sizes = [1, 8, 128], strides = [1, 1, 1]} : vector<8x8x128xf32> to vector<1x8x128xf32>
    %299 = vector.shape_cast %298 : vector<1x8x128xf32> to vector<8x128xf32>
    %300 = arith.addf %297, %299 : vector<8x128xf32>
    %cst_93 = arith.constant 7.500000e-01 : f32
    %301 = vector.broadcast %cst_93 : f32 to vector<8x128xf32>
    %302 = arith.mulf %301, %289 : vector<8x128xf32>
    %cst_94 = arith.constant 1.000000e+00 : f32
    %303 = vector.broadcast %cst_94 : f32 to vector<8x128xf32>
    %304 = arith.subf %303, %293 : vector<8x128xf32>
    %305 = arith.mulf %302, %304 : vector<8x128xf32>
    %306 = arith.addf %305, %300 : vector<8x128xf32>
    %307 = vector.extract_strided_slice %190 {offsets = [5, 0, 0], sizes = [1, 8, 128], strides = [1, 1, 1]} : vector<8x8x128xf32> to vector<1x8x128xf32>
    %308 = vector.shape_cast %307 : vector<1x8x128xf32> to vector<8x128xf32>
    %309 = arith.addf %306, %308 : vector<8x128xf32>
    %cst_95 = arith.constant 5.000000e-01 : f32
    %310 = vector.broadcast %cst_95 : f32 to vector<8x128xf32>
    %311 = arith.cmpf oge, %309, %310 : vector<8x128xf32>
    %312 = arith.extui %311 : vector<8x128xi1> to vector<8x128xi32>
    %313 = arith.sitofp %312 : vector<8x128xi32> to vector<8x128xf32>
    %314 = vector.extract_strided_slice %182 {offsets = [48, 0], sizes = [8, 128], strides = [1, 1]} : vector<64x128xf32> to vector<8x128xf32>
    %cst_96 = arith.constant 5.000000e-01 : f32
    %315 = vector.broadcast %cst_96 : f32 to vector<8x128xf32>
    %316 = arith.mulf %315, %300 : vector<8x128xf32>
    %317 = arith.addf %316, %314 : vector<8x128xf32>
    %318 = vector.extract_strided_slice %186 {offsets = [6, 0, 0], sizes = [1, 8, 128], strides = [1, 1, 1]} : vector<8x8x128xf32> to vector<1x8x128xf32>
    %319 = vector.shape_cast %318 : vector<1x8x128xf32> to vector<8x128xf32>
    %320 = arith.addf %317, %319 : vector<8x128xf32>
    %cst_97 = arith.constant 7.500000e-01 : f32
    %321 = vector.broadcast %cst_97 : f32 to vector<8x128xf32>
    %322 = arith.mulf %321, %309 : vector<8x128xf32>
    %cst_98 = arith.constant 1.000000e+00 : f32
    %323 = vector.broadcast %cst_98 : f32 to vector<8x128xf32>
    %324 = arith.subf %323, %313 : vector<8x128xf32>
    %325 = arith.mulf %322, %324 : vector<8x128xf32>
    %326 = arith.addf %325, %320 : vector<8x128xf32>
    %327 = vector.extract_strided_slice %190 {offsets = [6, 0, 0], sizes = [1, 8, 128], strides = [1, 1, 1]} : vector<8x8x128xf32> to vector<1x8x128xf32>
    %328 = vector.shape_cast %327 : vector<1x8x128xf32> to vector<8x128xf32>
    %329 = arith.addf %326, %328 : vector<8x128xf32>
    %cst_99 = arith.constant 5.000000e-01 : f32
    %330 = vector.broadcast %cst_99 : f32 to vector<8x128xf32>
    %331 = arith.cmpf oge, %329, %330 : vector<8x128xf32>
    %332 = arith.extui %331 : vector<8x128xi1> to vector<8x128xi32>
    %333 = arith.sitofp %332 : vector<8x128xi32> to vector<8x128xf32>
    %334 = vector.extract_strided_slice %182 {offsets = [56, 0], sizes = [8, 128], strides = [1, 1]} : vector<64x128xf32> to vector<8x128xf32>
    %cst_100 = arith.constant 5.000000e-01 : f32
    %335 = vector.broadcast %cst_100 : f32 to vector<8x128xf32>
    %336 = arith.mulf %335, %320 : vector<8x128xf32>
    %337 = arith.addf %336, %334 : vector<8x128xf32>
    %338 = vector.extract_strided_slice %186 {offsets = [7, 0, 0], sizes = [1, 8, 128], strides = [1, 1, 1]} : vector<8x8x128xf32> to vector<1x8x128xf32>
    %339 = vector.shape_cast %338 : vector<1x8x128xf32> to vector<8x128xf32>
    %340 = arith.addf %337, %339 : vector<8x128xf32>
    %cst_101 = arith.constant 7.500000e-01 : f32
    %341 = vector.broadcast %cst_101 : f32 to vector<8x128xf32>
    %342 = arith.mulf %341, %329 : vector<8x128xf32>
    %cst_102 = arith.constant 1.000000e+00 : f32
    %343 = vector.broadcast %cst_102 : f32 to vector<8x128xf32>
    %344 = arith.subf %343, %333 : vector<8x128xf32>
    %345 = arith.mulf %342, %344 : vector<8x128xf32>
    %346 = arith.addf %345, %340 : vector<8x128xf32>
    %347 = vector.extract_strided_slice %190 {offsets = [7, 0, 0], sizes = [1, 8, 128], strides = [1, 1, 1]} : vector<8x8x128xf32> to vector<1x8x128xf32>
    %348 = vector.shape_cast %347 : vector<1x8x128xf32> to vector<8x128xf32>
    %349 = arith.addf %346, %348 : vector<8x128xf32>
    %cst_103 = arith.constant 5.000000e-01 : f32
    %350 = vector.broadcast %cst_103 : f32 to vector<8x128xf32>
    %351 = arith.cmpf oge, %349, %350 : vector<8x128xf32>
    %352 = arith.extui %351 : vector<8x128xi1> to vector<8x128xi32>
    %353 = arith.sitofp %352 : vector<8x128xi32> to vector<8x128xf32>
    %354 = tpu.concatenate %213, %233, %253, %273, %293, %313, %333, %353 in 0 : vector<8x128xf32>, vector<8x128xf32>, vector<8x128xf32>, vector<8x128xf32>, vector<8x128xf32>, vector<8x128xf32>, vector<8x128xf32>, vector<8x128xf32> -> vector<64x128xf32>
    %c0_104 = arith.constant 0 : index
    %c0_105 = arith.constant 0 : index
    %355 = vector.load %arg14[%c0_104, %c0_105] : memref<128x128xf32, #tpu.memory_space<vmem>>, vector<128x128xf32>
    %cst_106 = arith.constant dense<0.000000e+00> : vector<64x128xf32>
    %356 = tpu.matmul %354, %355, %cst_106 {dimension_numbers = #tpu.dot_dimension_numbers<[1], [0], [0], [1], [0, 0, 1, 1], [], []>} : vector<64x128xf32>, vector<128x128xf32>, vector<64x128xf32> -> vector<64x128xf32>
    %c0_107 = arith.constant 0 : index
    %c0_108 = arith.constant 0 : index
    %357 = vector.load %arg15[%c0_107, %c0_108] : memref<1x128xf32, #tpu.memory_space<vmem>>, vector<1x128xf32>
    %358 = vector.broadcast %357 : vector<1x128xf32> to vector<64x128xf32>
    %359 = arith.addf %356, %358 : vector<64x128xf32>
    %c0_109 = arith.constant 0 : index
    %c0_110 = arith.constant 0 : index
    %c0_111 = arith.constant 0 : index
    %360 = vector.load %arg18[%c0_109, %c0_110, %c0_111] : memref<8x8x128xf32, #tpu.memory_space<vmem>>, vector<8x8x128xf32>
    %c0_112 = arith.constant 0 : index
    %c0_113 = arith.constant 0 : index
    %c0_114 = arith.constant 0 : index
    %361 = vector.load %arg16[%c0_112, %c0_113, %c0_114] : memref<1x1x128xf32, #tpu.memory_space<vmem>>, vector<1x1x128xf32>
    %362 = vector.broadcast %361 : vector<1x1x128xf32> to vector<8x8x128xf32>
    %363 = arith.mulf %360, %362 : vector<8x8x128xf32>
    %c0_115 = arith.constant 0 : index
    %c0_116 = arith.constant 0 : index
    %c0_117 = arith.constant 0 : index
    %364 = vector.load %arg19[%c0_115, %c0_116, %c0_117] : memref<8x8x128xf32, #tpu.memory_space<vmem>>, vector<8x8x128xf32>
    %c0_118 = arith.constant 0 : index
    %c0_119 = arith.constant 0 : index
    %c0_120 = arith.constant 0 : index
    %365 = vector.load %arg17[%c0_118, %c0_119, %c0_120] : memref<1x1x128xf32, #tpu.memory_space<vmem>>, vector<1x1x128xf32>
    %366 = vector.broadcast %365 : vector<1x1x128xf32> to vector<8x8x128xf32>
    %367 = arith.mulf %364, %366 : vector<8x8x128xf32>
    %c0_121 = arith.constant 0 : index
    %c0_122 = arith.constant 0 : index
    %368 = vector.load %arg20[%c0_121, %c0_122] : memref<128x128xf32, #tpu.memory_space<vmem>>, vector<128x128xf32>
    %cst_123 = arith.constant 0.000000e+00 : f32
    %369 = vector.broadcast %cst_123 : f32 to vector<8x128xf32>
    %cst_124 = arith.constant 0.000000e+00 : f32
    %370 = vector.broadcast %cst_124 : f32 to vector<8x128xf32>
    %cst_125 = arith.constant 0.000000e+00 : f32
    %371 = vector.broadcast %cst_125 : f32 to vector<8x128xf32>
    %372 = vector.extract_strided_slice %359 {offsets = [0, 0], sizes = [8, 128], strides = [1, 1]} : vector<64x128xf32> to vector<8x128xf32>
    %cst_126 = arith.constant dense<0.000000e+00> : vector<8x128xf32>
    %373 = tpu.matmul %371, %368, %cst_126 {dimension_numbers = #tpu.dot_dimension_numbers<[1], [0], [0], [1], [0, 0, 1, 1], [], []>} : vector<8x128xf32>, vector<128x128xf32>, vector<8x128xf32> -> vector<8x128xf32>
    %374 = arith.addf %372, %373 : vector<8x128xf32>
    %cst_127 = arith.constant 5.000000e-01 : f32
    %375 = vector.broadcast %cst_127 : f32 to vector<8x128xf32>
    %376 = arith.mulf %375, %369 : vector<8x128xf32>
    %377 = arith.addf %376, %374 : vector<8x128xf32>
    %378 = vector.extract_strided_slice %363 {offsets = [0, 0, 0], sizes = [1, 8, 128], strides = [1, 1, 1]} : vector<8x8x128xf32> to vector<1x8x128xf32>
    %379 = vector.shape_cast %378 : vector<1x8x128xf32> to vector<8x128xf32>
    %380 = arith.addf %377, %379 : vector<8x128xf32>
    %cst_128 = arith.constant 7.500000e-01 : f32
    %381 = vector.broadcast %cst_128 : f32 to vector<8x128xf32>
    %382 = arith.mulf %381, %370 : vector<8x128xf32>
    %cst_129 = arith.constant 1.000000e+00 : f32
    %383 = vector.broadcast %cst_129 : f32 to vector<8x128xf32>
    %384 = arith.subf %383, %371 : vector<8x128xf32>
    %385 = arith.mulf %382, %384 : vector<8x128xf32>
    %386 = arith.addf %385, %380 : vector<8x128xf32>
    %387 = vector.extract_strided_slice %367 {offsets = [0, 0, 0], sizes = [1, 8, 128], strides = [1, 1, 1]} : vector<8x8x128xf32> to vector<1x8x128xf32>
    %388 = vector.shape_cast %387 : vector<1x8x128xf32> to vector<8x128xf32>
    %389 = arith.addf %386, %388 : vector<8x128xf32>
    %cst_130 = arith.constant 5.000000e-01 : f32
    %390 = vector.broadcast %cst_130 : f32 to vector<8x128xf32>
    %391 = arith.cmpf oge, %389, %390 : vector<8x128xf32>
    %392 = arith.extui %391 : vector<8x128xi1> to vector<8x128xi32>
    %393 = arith.sitofp %392 : vector<8x128xi32> to vector<8x128xf32>
    %394 = vector.extract_strided_slice %359 {offsets = [8, 0], sizes = [8, 128], strides = [1, 1]} : vector<64x128xf32> to vector<8x128xf32>
    %cst_131 = arith.constant dense<0.000000e+00> : vector<8x128xf32>
    %395 = tpu.matmul %393, %368, %cst_131 {dimension_numbers = #tpu.dot_dimension_numbers<[1], [0], [0], [1], [0, 0, 1, 1], [], []>} : vector<8x128xf32>, vector<128x128xf32>, vector<8x128xf32> -> vector<8x128xf32>
    %396 = arith.addf %394, %395 : vector<8x128xf32>
    %cst_132 = arith.constant 5.000000e-01 : f32
    %397 = vector.broadcast %cst_132 : f32 to vector<8x128xf32>
    %398 = arith.mulf %397, %380 : vector<8x128xf32>
    %399 = arith.addf %398, %396 : vector<8x128xf32>
    %400 = vector.extract_strided_slice %363 {offsets = [1, 0, 0], sizes = [1, 8, 128], strides = [1, 1, 1]} : vector<8x8x128xf32> to vector<1x8x128xf32>
    %401 = vector.shape_cast %400 : vector<1x8x128xf32> to vector<8x128xf32>
    %402 = arith.addf %399, %401 : vector<8x128xf32>
    %cst_133 = arith.constant 7.500000e-01 : f32
    %403 = vector.broadcast %cst_133 : f32 to vector<8x128xf32>
    %404 = arith.mulf %403, %389 : vector<8x128xf32>
    %cst_134 = arith.constant 1.000000e+00 : f32
    %405 = vector.broadcast %cst_134 : f32 to vector<8x128xf32>
    %406 = arith.subf %405, %393 : vector<8x128xf32>
    %407 = arith.mulf %404, %406 : vector<8x128xf32>
    %408 = arith.addf %407, %402 : vector<8x128xf32>
    %409 = vector.extract_strided_slice %367 {offsets = [1, 0, 0], sizes = [1, 8, 128], strides = [1, 1, 1]} : vector<8x8x128xf32> to vector<1x8x128xf32>
    %410 = vector.shape_cast %409 : vector<1x8x128xf32> to vector<8x128xf32>
    %411 = arith.addf %408, %410 : vector<8x128xf32>
    %cst_135 = arith.constant 5.000000e-01 : f32
    %412 = vector.broadcast %cst_135 : f32 to vector<8x128xf32>
    %413 = arith.cmpf oge, %411, %412 : vector<8x128xf32>
    %414 = arith.extui %413 : vector<8x128xi1> to vector<8x128xi32>
    %415 = arith.sitofp %414 : vector<8x128xi32> to vector<8x128xf32>
    %416 = vector.extract_strided_slice %359 {offsets = [16, 0], sizes = [8, 128], strides = [1, 1]} : vector<64x128xf32> to vector<8x128xf32>
    %cst_136 = arith.constant dense<0.000000e+00> : vector<8x128xf32>
    %417 = tpu.matmul %415, %368, %cst_136 {dimension_numbers = #tpu.dot_dimension_numbers<[1], [0], [0], [1], [0, 0, 1, 1], [], []>} : vector<8x128xf32>, vector<128x128xf32>, vector<8x128xf32> -> vector<8x128xf32>
    %418 = arith.addf %416, %417 : vector<8x128xf32>
    %cst_137 = arith.constant 5.000000e-01 : f32
    %419 = vector.broadcast %cst_137 : f32 to vector<8x128xf32>
    %420 = arith.mulf %419, %402 : vector<8x128xf32>
    %421 = arith.addf %420, %418 : vector<8x128xf32>
    %422 = vector.extract_strided_slice %363 {offsets = [2, 0, 0], sizes = [1, 8, 128], strides = [1, 1, 1]} : vector<8x8x128xf32> to vector<1x8x128xf32>
    %423 = vector.shape_cast %422 : vector<1x8x128xf32> to vector<8x128xf32>
    %424 = arith.addf %421, %423 : vector<8x128xf32>
    %cst_138 = arith.constant 7.500000e-01 : f32
    %425 = vector.broadcast %cst_138 : f32 to vector<8x128xf32>
    %426 = arith.mulf %425, %411 : vector<8x128xf32>
    %cst_139 = arith.constant 1.000000e+00 : f32
    %427 = vector.broadcast %cst_139 : f32 to vector<8x128xf32>
    %428 = arith.subf %427, %415 : vector<8x128xf32>
    %429 = arith.mulf %426, %428 : vector<8x128xf32>
    %430 = arith.addf %429, %424 : vector<8x128xf32>
    %431 = vector.extract_strided_slice %367 {offsets = [2, 0, 0], sizes = [1, 8, 128], strides = [1, 1, 1]} : vector<8x8x128xf32> to vector<1x8x128xf32>
    %432 = vector.shape_cast %431 : vector<1x8x128xf32> to vector<8x128xf32>
    %433 = arith.addf %430, %432 : vector<8x128xf32>
    %cst_140 = arith.constant 5.000000e-01 : f32
    %434 = vector.broadcast %cst_140 : f32 to vector<8x128xf32>
    %435 = arith.cmpf oge, %433, %434 : vector<8x128xf32>
    %436 = arith.extui %435 : vector<8x128xi1> to vector<8x128xi32>
    %437 = arith.sitofp %436 : vector<8x128xi32> to vector<8x128xf32>
    %438 = vector.extract_strided_slice %359 {offsets = [24, 0], sizes = [8, 128], strides = [1, 1]} : vector<64x128xf32> to vector<8x128xf32>
    %cst_141 = arith.constant dense<0.000000e+00> : vector<8x128xf32>
    %439 = tpu.matmul %437, %368, %cst_141 {dimension_numbers = #tpu.dot_dimension_numbers<[1], [0], [0], [1], [0, 0, 1, 1], [], []>} : vector<8x128xf32>, vector<128x128xf32>, vector<8x128xf32> -> vector<8x128xf32>
    %440 = arith.addf %438, %439 : vector<8x128xf32>
    %cst_142 = arith.constant 5.000000e-01 : f32
    %441 = vector.broadcast %cst_142 : f32 to vector<8x128xf32>
    %442 = arith.mulf %441, %424 : vector<8x128xf32>
    %443 = arith.addf %442, %440 : vector<8x128xf32>
    %444 = vector.extract_strided_slice %363 {offsets = [3, 0, 0], sizes = [1, 8, 128], strides = [1, 1, 1]} : vector<8x8x128xf32> to vector<1x8x128xf32>
    %445 = vector.shape_cast %444 : vector<1x8x128xf32> to vector<8x128xf32>
    %446 = arith.addf %443, %445 : vector<8x128xf32>
    %cst_143 = arith.constant 7.500000e-01 : f32
    %447 = vector.broadcast %cst_143 : f32 to vector<8x128xf32>
    %448 = arith.mulf %447, %433 : vector<8x128xf32>
    %cst_144 = arith.constant 1.000000e+00 : f32
    %449 = vector.broadcast %cst_144 : f32 to vector<8x128xf32>
    %450 = arith.subf %449, %437 : vector<8x128xf32>
    %451 = arith.mulf %448, %450 : vector<8x128xf32>
    %452 = arith.addf %451, %446 : vector<8x128xf32>
    %453 = vector.extract_strided_slice %367 {offsets = [3, 0, 0], sizes = [1, 8, 128], strides = [1, 1, 1]} : vector<8x8x128xf32> to vector<1x8x128xf32>
    %454 = vector.shape_cast %453 : vector<1x8x128xf32> to vector<8x128xf32>
    %455 = arith.addf %452, %454 : vector<8x128xf32>
    %cst_145 = arith.constant 5.000000e-01 : f32
    %456 = vector.broadcast %cst_145 : f32 to vector<8x128xf32>
    %457 = arith.cmpf oge, %455, %456 : vector<8x128xf32>
    %458 = arith.extui %457 : vector<8x128xi1> to vector<8x128xi32>
    %459 = arith.sitofp %458 : vector<8x128xi32> to vector<8x128xf32>
    %460 = vector.extract_strided_slice %359 {offsets = [32, 0], sizes = [8, 128], strides = [1, 1]} : vector<64x128xf32> to vector<8x128xf32>
    %cst_146 = arith.constant dense<0.000000e+00> : vector<8x128xf32>
    %461 = tpu.matmul %459, %368, %cst_146 {dimension_numbers = #tpu.dot_dimension_numbers<[1], [0], [0], [1], [0, 0, 1, 1], [], []>} : vector<8x128xf32>, vector<128x128xf32>, vector<8x128xf32> -> vector<8x128xf32>
    %462 = arith.addf %460, %461 : vector<8x128xf32>
    %cst_147 = arith.constant 5.000000e-01 : f32
    %463 = vector.broadcast %cst_147 : f32 to vector<8x128xf32>
    %464 = arith.mulf %463, %446 : vector<8x128xf32>
    %465 = arith.addf %464, %462 : vector<8x128xf32>
    %466 = vector.extract_strided_slice %363 {offsets = [4, 0, 0], sizes = [1, 8, 128], strides = [1, 1, 1]} : vector<8x8x128xf32> to vector<1x8x128xf32>
    %467 = vector.shape_cast %466 : vector<1x8x128xf32> to vector<8x128xf32>
    %468 = arith.addf %465, %467 : vector<8x128xf32>
    %cst_148 = arith.constant 7.500000e-01 : f32
    %469 = vector.broadcast %cst_148 : f32 to vector<8x128xf32>
    %470 = arith.mulf %469, %455 : vector<8x128xf32>
    %cst_149 = arith.constant 1.000000e+00 : f32
    %471 = vector.broadcast %cst_149 : f32 to vector<8x128xf32>
    %472 = arith.subf %471, %459 : vector<8x128xf32>
    %473 = arith.mulf %470, %472 : vector<8x128xf32>
    %474 = arith.addf %473, %468 : vector<8x128xf32>
    %475 = vector.extract_strided_slice %367 {offsets = [4, 0, 0], sizes = [1, 8, 128], strides = [1, 1, 1]} : vector<8x8x128xf32> to vector<1x8x128xf32>
    %476 = vector.shape_cast %475 : vector<1x8x128xf32> to vector<8x128xf32>
    %477 = arith.addf %474, %476 : vector<8x128xf32>
    %cst_150 = arith.constant 5.000000e-01 : f32
    %478 = vector.broadcast %cst_150 : f32 to vector<8x128xf32>
    %479 = arith.cmpf oge, %477, %478 : vector<8x128xf32>
    %480 = arith.extui %479 : vector<8x128xi1> to vector<8x128xi32>
    %481 = arith.sitofp %480 : vector<8x128xi32> to vector<8x128xf32>
    %482 = vector.extract_strided_slice %359 {offsets = [40, 0], sizes = [8, 128], strides = [1, 1]} : vector<64x128xf32> to vector<8x128xf32>
    %cst_151 = arith.constant dense<0.000000e+00> : vector<8x128xf32>
    %483 = tpu.matmul %481, %368, %cst_151 {dimension_numbers = #tpu.dot_dimension_numbers<[1], [0], [0], [1], [0, 0, 1, 1], [], []>} : vector<8x128xf32>, vector<128x128xf32>, vector<8x128xf32> -> vector<8x128xf32>
    %484 = arith.addf %482, %483 : vector<8x128xf32>
    %cst_152 = arith.constant 5.000000e-01 : f32
    %485 = vector.broadcast %cst_152 : f32 to vector<8x128xf32>
    %486 = arith.mulf %485, %468 : vector<8x128xf32>
    %487 = arith.addf %486, %484 : vector<8x128xf32>
    %488 = vector.extract_strided_slice %363 {offsets = [5, 0, 0], sizes = [1, 8, 128], strides = [1, 1, 1]} : vector<8x8x128xf32> to vector<1x8x128xf32>
    %489 = vector.shape_cast %488 : vector<1x8x128xf32> to vector<8x128xf32>
    %490 = arith.addf %487, %489 : vector<8x128xf32>
    %cst_153 = arith.constant 7.500000e-01 : f32
    %491 = vector.broadcast %cst_153 : f32 to vector<8x128xf32>
    %492 = arith.mulf %491, %477 : vector<8x128xf32>
    %cst_154 = arith.constant 1.000000e+00 : f32
    %493 = vector.broadcast %cst_154 : f32 to vector<8x128xf32>
    %494 = arith.subf %493, %481 : vector<8x128xf32>
    %495 = arith.mulf %492, %494 : vector<8x128xf32>
    %496 = arith.addf %495, %490 : vector<8x128xf32>
    %497 = vector.extract_strided_slice %367 {offsets = [5, 0, 0], sizes = [1, 8, 128], strides = [1, 1, 1]} : vector<8x8x128xf32> to vector<1x8x128xf32>
    %498 = vector.shape_cast %497 : vector<1x8x128xf32> to vector<8x128xf32>
    %499 = arith.addf %496, %498 : vector<8x128xf32>
    %cst_155 = arith.constant 5.000000e-01 : f32
    %500 = vector.broadcast %cst_155 : f32 to vector<8x128xf32>
    %501 = arith.cmpf oge, %499, %500 : vector<8x128xf32>
    %502 = arith.extui %501 : vector<8x128xi1> to vector<8x128xi32>
    %503 = arith.sitofp %502 : vector<8x128xi32> to vector<8x128xf32>
    %504 = vector.extract_strided_slice %359 {offsets = [48, 0], sizes = [8, 128], strides = [1, 1]} : vector<64x128xf32> to vector<8x128xf32>
    %cst_156 = arith.constant dense<0.000000e+00> : vector<8x128xf32>
    %505 = tpu.matmul %503, %368, %cst_156 {dimension_numbers = #tpu.dot_dimension_numbers<[1], [0], [0], [1], [0, 0, 1, 1], [], []>} : vector<8x128xf32>, vector<128x128xf32>, vector<8x128xf32> -> vector<8x128xf32>
    %506 = arith.addf %504, %505 : vector<8x128xf32>
    %cst_157 = arith.constant 5.000000e-01 : f32
    %507 = vector.broadcast %cst_157 : f32 to vector<8x128xf32>
    %508 = arith.mulf %507, %490 : vector<8x128xf32>
    %509 = arith.addf %508, %506 : vector<8x128xf32>
    %510 = vector.extract_strided_slice %363 {offsets = [6, 0, 0], sizes = [1, 8, 128], strides = [1, 1, 1]} : vector<8x8x128xf32> to vector<1x8x128xf32>
    %511 = vector.shape_cast %510 : vector<1x8x128xf32> to vector<8x128xf32>
    %512 = arith.addf %509, %511 : vector<8x128xf32>
    %cst_158 = arith.constant 7.500000e-01 : f32
    %513 = vector.broadcast %cst_158 : f32 to vector<8x128xf32>
    %514 = arith.mulf %513, %499 : vector<8x128xf32>
    %cst_159 = arith.constant 1.000000e+00 : f32
    %515 = vector.broadcast %cst_159 : f32 to vector<8x128xf32>
    %516 = arith.subf %515, %503 : vector<8x128xf32>
    %517 = arith.mulf %514, %516 : vector<8x128xf32>
    %518 = arith.addf %517, %512 : vector<8x128xf32>
    %519 = vector.extract_strided_slice %367 {offsets = [6, 0, 0], sizes = [1, 8, 128], strides = [1, 1, 1]} : vector<8x8x128xf32> to vector<1x8x128xf32>
    %520 = vector.shape_cast %519 : vector<1x8x128xf32> to vector<8x128xf32>
    %521 = arith.addf %518, %520 : vector<8x128xf32>
    %cst_160 = arith.constant 5.000000e-01 : f32
    %522 = vector.broadcast %cst_160 : f32 to vector<8x128xf32>
    %523 = arith.cmpf oge, %521, %522 : vector<8x128xf32>
    %524 = arith.extui %523 : vector<8x128xi1> to vector<8x128xi32>
    %525 = arith.sitofp %524 : vector<8x128xi32> to vector<8x128xf32>
    %526 = vector.extract_strided_slice %359 {offsets = [56, 0], sizes = [8, 128], strides = [1, 1]} : vector<64x128xf32> to vector<8x128xf32>
    %cst_161 = arith.constant dense<0.000000e+00> : vector<8x128xf32>
    %527 = tpu.matmul %525, %368, %cst_161 {dimension_numbers = #tpu.dot_dimension_numbers<[1], [0], [0], [1], [0, 0, 1, 1], [], []>} : vector<8x128xf32>, vector<128x128xf32>, vector<8x128xf32> -> vector<8x128xf32>
    %528 = arith.addf %526, %527 : vector<8x128xf32>
    %cst_162 = arith.constant 5.000000e-01 : f32
    %529 = vector.broadcast %cst_162 : f32 to vector<8x128xf32>
    %530 = arith.mulf %529, %512 : vector<8x128xf32>
    %531 = arith.addf %530, %528 : vector<8x128xf32>
    %532 = vector.extract_strided_slice %363 {offsets = [7, 0, 0], sizes = [1, 8, 128], strides = [1, 1, 1]} : vector<8x8x128xf32> to vector<1x8x128xf32>
    %533 = vector.shape_cast %532 : vector<1x8x128xf32> to vector<8x128xf32>
    %534 = arith.addf %531, %533 : vector<8x128xf32>
    %cst_163 = arith.constant 7.500000e-01 : f32
    %535 = vector.broadcast %cst_163 : f32 to vector<8x128xf32>
    %536 = arith.mulf %535, %521 : vector<8x128xf32>
    %cst_164 = arith.constant 1.000000e+00 : f32
    %537 = vector.broadcast %cst_164 : f32 to vector<8x128xf32>
    %538 = arith.subf %537, %525 : vector<8x128xf32>
    %539 = arith.mulf %536, %538 : vector<8x128xf32>
    %540 = arith.addf %539, %534 : vector<8x128xf32>
    %541 = vector.extract_strided_slice %367 {offsets = [7, 0, 0], sizes = [1, 8, 128], strides = [1, 1, 1]} : vector<8x8x128xf32> to vector<1x8x128xf32>
    %542 = vector.shape_cast %541 : vector<1x8x128xf32> to vector<8x128xf32>
    %543 = arith.addf %540, %542 : vector<8x128xf32>
    %cst_165 = arith.constant 5.000000e-01 : f32
    %544 = vector.broadcast %cst_165 : f32 to vector<8x128xf32>
    %545 = arith.cmpf oge, %543, %544 : vector<8x128xf32>
    %546 = arith.extui %545 : vector<8x128xi1> to vector<8x128xi32>
    %547 = arith.sitofp %546 : vector<8x128xi32> to vector<8x128xf32>
    %548 = tpu.concatenate %393, %415, %437, %459, %481, %503, %525, %547 in 0 : vector<8x128xf32>, vector<8x128xf32>, vector<8x128xf32>, vector<8x128xf32>, vector<8x128xf32>, vector<8x128xf32>, vector<8x128xf32>, vector<8x128xf32> -> vector<64x128xf32>
    %c0_166 = arith.constant 0 : index
    %c0_167 = arith.constant 0 : index
    %549 = vector.load %arg21[%c0_166, %c0_167] : memref<64x128xf32, #tpu.memory_space<vmem>>, vector<64x128xf32>
    tpu.vector_store %arg21[%c0_166, %c0_167], %548 {strides = array<i32>} : memref<64x128xf32, #tpu.memory_space<vmem>>, vector<64x128xf32>,
    return
  }
  func.func @transform_0(%arg0: i32) -> (i32, i32) {
    %c0_i32 = arith.constant 0 : i32
    %c0_i32_0 = arith.constant 0 : i32
    %c0_i32_1 = arith.constant 0 : i32
    return %c0_i32, %c0_i32_0 : i32, i32
  }
  func.func @transform_1(%arg0: i32) -> (i32, i32) {
    %c0_i32 = arith.constant 0 : i32
    %c0_i32_0 = arith.constant 0 : i32
    %c0_i32_1 = arith.constant 0 : i32
    return %c0_i32, %c0_i32_0 : i32, i32
  }
  func.func @transform_2(%arg0: i32) -> (i32, i32) {
    %c0_i32 = arith.constant 0 : i32
    %c0_i32_0 = arith.constant 0 : i32
    %c0_i32_1 = arith.constant 0 : i32
    return %c0_i32, %c0_i32_0 : i32, i32
  }
  func.func @transform_3(%arg0: i32) -> (i32, i32, i32) {
    %c0_i32 = arith.constant 0 : i32
    %c0_i32_0 = arith.constant 0 : i32
    %c0_i32_1 = arith.constant 0 : i32
    %c0_i32_2 = arith.constant 0 : i32
    return %c0_i32, %c0_i32_0, %c0_i32_1 : i32, i32, i32
  }
  func.func @transform_4(%arg0: i32) -> (i32, i32, i32) {
    %c0_i32 = arith.constant 0 : i32
    %c0_i32_0 = arith.constant 0 : i32
    %c0_i32_1 = arith.constant 0 : i32
    %c0_i32_2 = arith.constant 0 : i32
    return %c0_i32, %c0_i32_0, %c0_i32_1 : i32, i32, i32
  }
  func.func @transform_5(%arg0: i32) -> (i32, i32, i32) {
    %c0_i32 = arith.constant 0 : i32
    %c0_i32_0 = arith.constant 0 : i32
    %c0_i32_1 = arith.constant 0 : i32
    %c0_i32_2 = arith.constant 0 : i32
    return %c0_i32, %c0_i32_0, %c0_i32_1 : i32, i32, i32
  }
  func.func @transform_6(%arg0: i32) -> (i32, i32, i32) {
    %c0_i32 = arith.constant 0 : i32
    %c0_i32_0 = arith.constant 0 : i32
    %c0_i32_1 = arith.constant 0 : i32
    %c0_i32_2 = arith.constant 0 : i32
    return %c0_i32, %c0_i32_0, %c0_i32_1 : i32, i32, i32
  }
  func.func @transform_7(%arg0: i32) -> (i32, i32) {
    %c0_i32 = arith.constant 0 : i32
    %c0_i32_0 = arith.constant 0 : i32
    %c0_i32_1 = arith.constant 0 : i32
    return %c0_i32, %c0_i32_0 : i32, i32
  }
  func.func @transform_8(%arg0: i32) -> (i32, i32) {
    %c0_i32 = arith.constant 0 : i32
    %c0_i32_0 = arith.constant 0 : i32
    %c0_i32_1 = arith.constant 0 : i32
    return %c0_i32, %c0_i32_0 : i32, i32
  }
  func.func @transform_9(%arg0: i32) -> (i32, i32, i32) {
    %c0_i32 = arith.constant 0 : i32
    %c0_i32_0 = arith.constant 0 : i32
    %c0_i32_1 = arith.constant 0 : i32
    %c0_i32_2 = arith.constant 0 : i32
    return %c0_i32, %c0_i32_0, %c0_i32_1 : i32, i32, i32
  }
  func.func @transform_10(%arg0: i32) -> (i32, i32, i32) {
    %c0_i32 = arith.constant 0 : i32
    %c0_i32_0 = arith.constant 0 : i32
    %c0_i32_1 = arith.constant 0 : i32
    %c0_i32_2 = arith.constant 0 : i32
    return %c0_i32, %c0_i32_0, %c0_i32_1 : i32, i32, i32
  }
  func.func @transform_11(%arg0: i32) -> (i32, i32, i32) {
    %c0_i32 = arith.constant 0 : i32
    %c0_i32_0 = arith.constant 0 : i32
    %c0_i32_1 = arith.constant 0 : i32
    %c0_i32_2 = arith.constant 0 : i32
    return %c0_i32, %c0_i32_0, %c0_i32_1 : i32, i32, i32
  }
  func.func @transform_12(%arg0: i32) -> (i32, i32, i32) {
    %c0_i32 = arith.constant 0 : i32
    %c0_i32_0 = arith.constant 0 : i32
    %c0_i32_1 = arith.constant 0 : i32
    %c0_i32_2 = arith.constant 0 : i32
    return %c0_i32, %c0_i32_0, %c0_i32_1 : i32, i32, i32
  }
  func.func @transform_13(%arg0: i32) -> (i32, i32) {
    %c0_i32 = arith.constant 0 : i32
    %c0_i32_0 = arith.constant 0 : i32
    %c0_i32_1 = arith.constant 0 : i32
    return %c0_i32, %c0_i32_0 : i32, i32
  }
  func.func @transform_14(%arg0: i32) -> (i32, i32) {
    %c0_i32 = arith.constant 0 : i32
    %c0_i32_0 = arith.constant 0 : i32
    %c0_i32_1 = arith.constant 0 : i32
    return %c0_i32, %c0_i32_0 : i32, i32
  }
  func.func @transform_15(%arg0: i32) -> (i32, i32, i32) {
    %c0_i32 = arith.constant 0 : i32
    %c0_i32_0 = arith.constant 0 : i32
    %c0_i32_1 = arith.constant 0 : i32
    %c0_i32_2 = arith.constant 0 : i32
    return %c0_i32, %c0_i32_0, %c0_i32_1 : i32, i32, i32
  }
  func.func @transform_16(%arg0: i32) -> (i32, i32, i32) {
    %c0_i32 = arith.constant 0 : i32
    %c0_i32_0 = arith.constant 0 : i32
    %c0_i32_1 = arith.constant 0 : i32
    %c0_i32_2 = arith.constant 0 : i32
    return %c0_i32, %c0_i32_0, %c0_i32_1 : i32, i32, i32
  }
  func.func @transform_17(%arg0: i32) -> (i32, i32, i32) {
    %c0_i32 = arith.constant 0 : i32
    %c0_i32_0 = arith.constant 0 : i32
    %c0_i32_1 = arith.constant 0 : i32
    %c0_i32_2 = arith.constant 0 : i32
    return %c0_i32, %c0_i32_0, %c0_i32_1 : i32, i32, i32
  }
  func.func @transform_18(%arg0: i32) -> (i32, i32, i32) {
    %c0_i32 = arith.constant 0 : i32
    %c0_i32_0 = arith.constant 0 : i32
    %c0_i32_1 = arith.constant 0 : i32
    %c0_i32_2 = arith.constant 0 : i32
    return %c0_i32, %c0_i32_0, %c0_i32_1 : i32, i32, i32
  }
  func.func @transform_19(%arg0: i32) -> (i32, i32) {
    %c0_i32 = arith.constant 0 : i32
    %c0_i32_0 = arith.constant 0 : i32
    %c0_i32_1 = arith.constant 0 : i32
    return %c0_i32, %c0_i32_0 : i32, i32
  }
  func.func @transform_20(%arg0: i32) -> (i32, i32) {
    %c0_i32 = arith.constant 0 : i32
    %c0_i32_0 = arith.constant 0 : i32
    %c0_i32_1 = arith.constant 0 : i32
    return %c0_i32, %c0_i32_0 : i32, i32
  }
}

</mosaic_0001>

<llo_original>
// kernel: noisy_spike_mlp_forward.1
$region0: #{noisy_spike_mlp_forward.1}
  #allocation0 [shape = 'u32[]', space=smem, size = 0x4, offset = 0x4, fixed_abs, tag = 'smem constant byte address 0x4 - core index']
  #allocation1 [shape = 'u32[144,128]{1,0:T(1,128)}', space=vmem, size = 0x12000, scoped, tag = 'internal scratch']
  %s0 = inlined_call_operand.vmem [shape: f32[64,128], index: 0, kind: input, shape index: {}]
  %s1 = inlined_call_operand.vmem [shape: f32[128,128], index: 1, kind: input, shape index: {}]
  %s2 = inlined_call_operand.vmem [shape: f32[1,128], index: 2, kind: input, shape index: {}]
  %s3 = inlined_call_operand.vmem [shape: f32[1,1,128], index: 3, kind: input, shape index: {}]
  %s4 = inlined_call_operand.vmem [shape: f32[1,1,128], index: 4, kind: input, shape index: {}]
  %s5 = inlined_call_operand.vmem [shape: f32[8,8,128], index: 5, kind: input, shape index: {}]
  %s6 = inlined_call_operand.vmem [shape: f32[8,8,128], index: 6, kind: input, shape index: {}]
  %s7 = inlined_call_operand.vmem [shape: f32[128,128], index: 7, kind: input, shape index: {}]
  %s8 = inlined_call_operand.vmem [shape: f32[1,128], index: 8, kind: input, shape index: {}]
  %s9 = inlined_call_operand.vmem [shape: f32[1,1,128], index: 9, kind: input, shape index: {}]
  %s10 = inlined_call_operand.vmem [shape: f32[1,1,128], index: 10, kind: input, shape index: {}]
  %s11 = inlined_call_operand.vmem [shape: f32[8,8,128], index: 11, kind: input, shape index: {}]
  %s12 = inlined_call_operand.vmem [shape: f32[8,8,128], index: 12, kind: input, shape index: {}]
  %s13 = inlined_call_operand.vmem [shape: f32[128,128], index: 13, kind: input, shape index: {}]
  %s14 = inlined_call_operand.vmem [shape: f32[1,128], index: 14, kind: input, shape index: {}]
  %s15 = inlined_call_operand.vmem [shape: f32[1,1,128], index: 15, kind: input, shape index: {}]
  %s16 = inlined_call_operand.vmem [shape: f32[1,1,128], index: 16, kind: input, shape index: {}]
  %s17 = inlined_call_operand.vmem [shape: f32[8,8,128], index: 17, kind: input, shape index: {}]
  %s18 = inlined_call_operand.vmem [shape: f32[8,8,128], index: 18, kind: input, shape index: {}]
  %s19 = inlined_call_operand.vmem [shape: f32[128,128], index: 19, kind: input, shape index: {}]
  %s20 = inlined_call_operand.vmem [shape: f32[64,128], index: 20, kind: output, shape index: {}]
  %s21 = sld [smem:[#allocation0]]
  $region90: #{noisy_spike_mlp_forward.1} parent=0
    _
  %s23 = ssub.s32 1, %s21
  %s24 = scalar_select 0, %s23, %s21
  // Predicated region
  $region2: #{noisy_spike_mlp_forward.1} parent=0 // pred_check
    _
  $region3: #{noisy_spike_mlp_forward.1} parent=0 // pred_check_branch
    %26 = sbr.rel (0) target = $region5
  $region4: #{noisy_spike_mlp_forward.1} parent=0 // pred_region
    _
  $region5: #{noisy_spike_mlp_forward.1} parent=0 // pred_fallthru
    _
  // Predicated region
  $region6: #{noisy_spike_mlp_forward.1} parent=0 // pred_check
    _
  $region7: #{noisy_spike_mlp_forward.1} parent=0 // pred_check_branch
    %28 = sbr.rel (0) target = $region9
  $region8: #{noisy_spike_mlp_forward.1} parent=0 // pred_region
    _
  $region9: #{noisy_spike_mlp_forward.1} parent=0 // pred_fallthru
    _
  // Predicated region
  $region10: #{noisy_spike_mlp_forward.1} parent=0 // pred_check
    _
  $region11: #{noisy_spike_mlp_forward.1} parent=0 // pred_check_branch
    %30 = sbr.rel (0) target = $region13
  $region12: #{noisy_spike_mlp_forward.1} parent=0 // pred_region
    _
  $region13: #{noisy_spike_mlp_forward.1} parent=0 // pred_fallthru
    _
  // Predicated region
  $region14: #{noisy_spike_mlp_forward.1} parent=0 // pred_check
    _
  $region15: #{noisy_spike_mlp_forward.1} parent=0 // pred_check_branch
    %32 = sbr.rel (0) target = $region17
  $region16: #{noisy_spike_mlp_forward.1} parent=0 // pred_region
    _
  $region17: #{noisy_spike_mlp_forward.1} parent=0 // pred_fallthru
    _
  // Predicated region
  $region18: #{noisy_spike_mlp_forward.1} parent=0 // pred_check
    _
  $region19: #{noisy_spike_mlp_forward.1} parent=0 // pred_check_branch
    %34 = sbr.rel (0) target = $region21
  $region20: #{noisy_spike_mlp_forward.1} parent=0 // pred_region
    _
  $region21: #{noisy_spike_mlp_forward.1} parent=0 // pred_fallthru
    _
  // Predicated region
  $region22: #{noisy_spike_mlp_forward.1} parent=0 // pred_check
    _
  $region23: #{noisy_spike_mlp_forward.1} parent=0 // pred_check_branch
    %36 = sbr.rel (0) target = $region25
  $region24: #{noisy_spike_mlp_forward.1} parent=0 // pred_region
    _
  $region25: #{noisy_spike_mlp_forward.1} parent=0 // pred_fallthru
    _
  // Predicated region
  $region26: #{noisy_spike_mlp_forward.1} parent=0 // pred_check
    _
  $region27: #{noisy_spike_mlp_forward.1} parent=0 // pred_check_branch
    %38 = sbr.rel (0) target = $region29
  $region28: #{noisy_spike_mlp_forward.1} parent=0 // pred_region
    _
  $region29: #{noisy_spike_mlp_forward.1} parent=0 // pred_fallthru
    _
  // Predicated region
  $region30: #{noisy_spike_mlp_forward.1} parent=0 // pred_check
    _
  $region31: #{noisy_spike_mlp_forward.1} parent=0 // pred_check_branch
    %40 = sbr.rel (0) target = $region33
  $region32: #{noisy_spike_mlp_forward.1} parent=0 // pred_region
    _
  $region33: #{noisy_spike_mlp_forward.1} parent=0 // pred_fallthru
    _
  // Predicated region
  $region34: #{noisy_spike_mlp_forward.1} parent=0 // pred_check
    _
  $region35: #{noisy_spike_mlp_forward.1} parent=0 // pred_check_branch
    %42 = sbr.rel (0) target = $region37
  $region36: #{noisy_spike_mlp_forward.1} parent=0 // pred_region
    _
  $region37: #{noisy_spike_mlp_forward.1} parent=0 // pred_fallthru
    _
  // Predicated region
  $region38: #{noisy_spike_mlp_forward.1} parent=0 // pred_check
    _
  $region39: #{noisy_spike_mlp_forward.1} parent=0 // pred_check_branch
    %44 = sbr.rel (0) target = $region41
  $region40: #{noisy_spike_mlp_forward.1} parent=0 // pred_region
    _
  $region41: #{noisy_spike_mlp_forward.1} parent=0 // pred_fallthru
    _
  // Predicated region
  $region42: #{noisy_spike_mlp_forward.1} parent=0 // pred_check
    _
  $region43: #{noisy_spike_mlp_forward.1} parent=0 // pred_check_branch
    %46 = sbr.rel (0) target = $region45
  $region44: #{noisy_spike_mlp_forward.1} parent=0 // pred_region
    _
  $region45: #{noisy_spike_mlp_forward.1} parent=0 // pred_fallthru
    _
  // Predicated region
  $region46: #{noisy_spike_mlp_forward.1} parent=0 // pred_check
    _
  $region47: #{noisy_spike_mlp_forward.1} parent=0 // pred_check_branch
    %48 = sbr.rel (0) target = $region49
  $region48: #{noisy_spike_mlp_forward.1} parent=0 // pred_region
    _
  $region49: #{noisy_spike_mlp_forward.1} parent=0 // pred_fallthru
    _
  // Predicated region
  $region50: #{noisy_spike_mlp_forward.1} parent=0 // pred_check
    _
  $region51: #{noisy_spike_mlp_forward.1} parent=0 // pred_check_branch
    %50 = sbr.rel (0) target = $region53
  $region52: #{noisy_spike_mlp_forward.1} parent=0 // pred_region
    _
  $region53: #{noisy_spike_mlp_forward.1} parent=0 // pred_fallthru
    _
  // Predicated region
  $region54: #{noisy_spike_mlp_forward.1} parent=0 // pred_check
    _
  $region55: #{noisy_spike_mlp_forward.1} parent=0 // pred_check_branch
    %52 = sbr.rel (0) target = $region57
  $region56: #{noisy_spike_mlp_forward.1} parent=0 // pred_region
    _
  $region57: #{noisy_spike_mlp_forward.1} parent=0 // pred_fallthru
    _
  // Predicated region
  $region58: #{noisy_spike_mlp_forward.1} parent=0 // pred_check
    _
  $region59: #{noisy_spike_mlp_forward.1} parent=0 // pred_check_branch
    %54 = sbr.rel (0) target = $region61
  $region60: #{noisy_spike_mlp_forward.1} parent=0 // pred_region
    _
  $region61: #{noisy_spike_mlp_forward.1} parent=0 // pred_fallthru
    _
  // Predicated region
  $region62: #{noisy_spike_mlp_forward.1} parent=0 // pred_check
    _
  $region63: #{noisy_spike_mlp_forward.1} parent=0 // pred_check_branch
    %56 = sbr.rel (0) target = $region65
  $region64: #{noisy_spike_mlp_forward.1} parent=0 // pred_region
    _
  $region65: #{noisy_spike_mlp_forward.1} parent=0 // pred_fallthru
    _
  // Predicated region
  $region66: #{noisy_spike_mlp_forward.1} parent=0 // pred_check
    _
  $region67: #{noisy_spike_mlp_forward.1} parent=0 // pred_check_branch
    %58 = sbr.rel (0) target = $region69
  $region68: #{noisy_spike_mlp_forward.1} parent=0 // pred_region
    _
  $region69: #{noisy_spike_mlp_forward.1} parent=0 // pred_fallthru
    _
  // Predicated region
  $region70: #{noisy_spike_mlp_forward.1} parent=0 // pred_check
    _
  $region71: #{noisy_spike_mlp_forward.1} parent=0 // pred_check_branch
    %60 = sbr.rel (0) target = $region73
  $region72: #{noisy_spike_mlp_forward.1} parent=0 // pred_region
    _
  $region73: #{noisy_spike_mlp_forward.1} parent=0 // pred_fallthru
    _
  // Predicated region
  $region74: #{noisy_spike_mlp_forward.1} parent=0 // pred_check
    _
  $region75: #{noisy_spike_mlp_forward.1} parent=0 // pred_check_branch
    %62 = sbr.rel (0) target = $region77
  $region76: #{noisy_spike_mlp_forward.1} parent=0 // pred_region
    _
  $region77: #{noisy_spike_mlp_forward.1} parent=0 // pred_fallthru
    _
  // Predicated region
  $region78: #{noisy_spike_mlp_forward.1} parent=0 // pred_check
    _
  $region79: #{noisy_spike_mlp_forward.1} parent=0 // pred_check_branch
    %64 = sbr.rel (0) target = $region81
  $region80: #{noisy_spike_mlp_forward.1} parent=0 // pred_region
    _
  $region81: #{noisy_spike_mlp_forward.1} parent=0 // pred_fallthru
    _
  %v65 = vld [vmem:[%s0] sm:$0xff]
  %v66 = vld [vmem:[%s0 + $0x8] sm:$0xff]
  %v67 = vld [vmem:[%s0 + $0x10] sm:$0xff]
  %v68 = vld [vmem:[%s0 + $0x18] sm:$0xff]
  %v69 = vld [vmem:[%s0 + $0x20] sm:$0xff]
  %v70 = vld [vmem:[%s0 + $0x28] sm:$0xff]
  %v71 = vld [vmem:[%s0 + $0x30] sm:$0xff]
  %v72 = vld [vmem:[%s0 + $0x38] sm:$0xff]
  %v73 = vld [vmem:[%s1] sm:$0xff]
  %v74 = vld [vmem:[%s1 + $0x8] sm:$0xff]
  %v75 = vld [vmem:[%s1 + $0x10] sm:$0xff]
  %v76 = vld [vmem:[%s1 + $0x18] sm:$0xff]
  %v77 = vld [vmem:[%s1 + $0x20] sm:$0xff]
  %v78 = vld [vmem:[%s1 + $0x28] sm:$0xff]
  %v79 = vld [vmem:[%s1 + $0x30] sm:$0xff]
  %v80 = vld [vmem:[%s1 + $0x38] sm:$0xff]
  %v81 = vld [vmem:[%s1 + $0x40] sm:$0xff]
  %v82 = vld [vmem:[%s1 + $0x48] sm:$0xff]
  %v83 = vld [vmem:[%s1 + $0x50] sm:$0xff]
  %v84 = vld [vmem:[%s1 + $0x58] sm:$0xff]
  %v85 = vld [vmem:[%s1 + $0x60] sm:$0xff]
  %v86 = vld [vmem:[%s1 + $0x68] sm:$0xff]
  %v87 = vld [vmem:[%s1 + $0x70] sm:$0xff]
  %v88 = vld [vmem:[%s1 + $0x78] sm:$0xff]
  %v89 = vld [vmem:[%s2] sm:$0x1]
  %v91 = vlaneseq
  %v92 = vshrl.u32 %v91, 7
  %v93 = vsub.s32 0, %v92
  %v94 = vrot.slane %v89, %v93
  %96 = vmatprep.subr.mxu0 0.0
  %97 = vmatpush1.msra.mxu0 %v73
  %98 = vmatprep.subr.mxu0 0.0
  %99 = vmatpush1.msra.mxu0 %v74
  %100 = vmatprep.subr.mxu0 0.0
  %101 = vmatpush1.msra.mxu0 %v75
  %102 = vmatprep.subr.mxu0 0.0
  %103 = vmatpush1.msra.mxu0 %v76
  %104 = vmatprep.subr.mxu0 0.0
  %105 = vmatpush1.msra.mxu0 %v77
  %106 = vmatprep.subr.mxu0 0.0
  %107 = vmatpush1.msra.mxu0 %v78
  %108 = vmatprep.subr.mxu0 0.0
  %109 = vmatpush1.msra.mxu0 %v79
  %110 = vmatprep.subr.mxu0 0.0
  %111 = vmatpush1.msra.mxu0 %v80
  %112 = vmatprep.subr.mxu0 0.0
  %113 = vmatpush1.msra.mxu0 %v81
  %114 = vmatprep.subr.mxu0 0.0
  %115 = vmatpush1.msra.mxu0 %v82
  %116 = vmatprep.subr.mxu0 0.0
  %117 = vmatpush1.msra.mxu0 %v83
  %118 = vmatprep.subr.mxu0 0.0
  %119 = vmatpush1.msra.mxu0 %v84
  %120 = vmatprep.subr.mxu0 0.0
  %121 = vmatpush1.msra.mxu0 %v85
  %122 = vmatprep.subr.mxu0 0.0
  %123 = vmatpush1.msra.mxu0 %v86
  %124 = vmatprep.subr.mxu0 0.0
  %125 = vmatpush1.msra.mxu0 %v87
  %126 = vmatprep.subr.mxu0 0.0
  %127 = vmatpush1.msra.mxu0 %v88
  %128 = vmatprep.subr.mxu0 0.0
  %129 = vmatpush1.msra.mxu0 0.0
  %130 = vmatprep.subr.mxu0 0.0
  %131 = vmatpush1.msra.mxu0 0.0
  %132 = vmatprep.subr.mxu0 0.0
  %133 = vmatpush1.msra.mxu0 0.0
  %134 = vmatprep.subr.mxu0 0.0
  %135 = vmatpush1.msra.mxu0 0.0
  %136 = vmatprep.subr.mxu0 0.0
  %137 = vmatpush1.msra.mxu0 0.0
  %138 = vmatprep.subr.mxu0 0.0
  %139 = vmatpush1.msra.mxu0 0.0
  %140 = vmatprep.subr.mxu0 0.0
  %141 = vmatpush1.msra.mxu0 0.0
  %142 = vmatprep.subr.mxu0 0.0
  %143 = vmatpush1.msra.mxu0 0.0
  %144 = vmatprep.subr.mxu0 0.0
  %145 = vmatpush1.msra.mxu0 0.0
  %146 = vmatprep.subr.mxu0 0.0
  %147 = vmatpush1.msra.mxu0 0.0
  %148 = vmatprep.subr.mxu0 0.0
  %149 = vmatpush1.msra.mxu0 0.0
  %150 = vmatprep.subr.mxu0 0.0
  %151 = vmatpush1.msra.mxu0 0.0
  %152 = vmatprep.subr.mxu0 0.0
  %153 = vmatpush1.msra.mxu0 0.0
  %154 = vmatprep.subr.mxu0 0.0
  %155 = vmatpush1.msra.mxu0 0.0
  %156 = vmatprep.subr.mxu0 0.0
  %157 = vmatpush1.msra.mxu0 0.0
  %158 = vmatprep.subr.mxu0 0.0
  %159 = vmatpush1.msra.mxu0 0.0
  %160 = vmatprep.mubr.f32.mxu0 0.0
  %161 = vmatmul.mubr.f32.gmra.mrb[0].mxu0 %v65
  %v162 = vpop.f32.mrb[0].mxu0
  %v163 = vadd.f32 %v94, %v162
  %v164 = vpop.f32.mrb[0].mxu0
  %165 = vmatprep.mubr.f32.mxu0 0.0
  %166 = vmatmul.mubr.f32.gmra.mrb[0].mxu0 %v66
  %v167 = vpop.f32.mrb[0].mxu0
  %v168 = vadd.f32 %v94, %v167
  %v169 = vpop.f32.mrb[0].mxu0
  %170 = vmatprep.mubr.f32.mxu0 0.0
  %171 = vmatmul.mubr.f32.gmra.mrb[0].mxu0 %v67
  %v172 = vpop.f32.mrb[0].mxu0
  %v173 = vadd.f32 %v94, %v172
  %v174 = vpop.f32.mrb[0].mxu0
  %175 = vmatprep.mubr.f32.mxu0 0.0
  %176 = vmatmul.mubr.f32.gmra.mrb[0].mxu0 %v68
  %v177 = vpop.f32.mrb[0].mxu0
  %v178 = vadd.f32 %v94, %v177
  %v179 = vpop.f32.mrb[0].mxu0
  %180 = vmatprep.mubr.f32.mxu0 0.0
  %181 = vmatmul.mubr.f32.gmra.mrb[0].mxu0 %v69
  %v182 = vpop.f32.mrb[0].mxu0
  %v183 = vadd.f32 %v94, %v182
  %v184 = vpop.f32.mrb[0].mxu0
  %185 = vmatprep.mubr.f32.mxu0 0.0
  %186 = vmatmul.mubr.f32.gmra.mrb[0].mxu0 %v70
  %v187 = vpop.f32.mrb[0].mxu0
  %v188 = vadd.f32 %v94, %v187
  %v189 = vpop.f32.mrb[0].mxu0
  %190 = vmatprep.mubr.f32.mxu0 0.0
  %191 = vmatmul.mubr.f32.gmra.mrb[0].mxu0 %v71
  %v192 = vpop.f32.mrb[0].mxu0
  %v193 = vadd.f32 %v94, %v192
  %v194 = vpop.f32.mrb[0].mxu0
  %195 = vmatprep.mubr.f32.mxu0 0.0
  %196 = vmatmul.mubr.f32.gmra.mrb[0].mxu0 %v72
  %v197 = vpop.f32.mrb[0].mxu0
  %v198 = vadd.f32 %v94, %v197
  %v199 = vpop.f32.mrb[0].mxu0
  %200 = vdwg.mxu0
  %v201 = vld [vmem:[%s5] sm:$0xff]
  %v202 = vld [vmem:[%s5 + $0x8] sm:$0xff]
  %v203 = vld [vmem:[%s5 + $0x10] sm:$0xff]
  %v204 = vld [vmem:[%s5 + $0x18] sm:$0xff]
  %v205 = vld [vmem:[%s5 + $0x20] sm:$0xff]
  %v206 = vld [vmem:[%s5 + $0x28] sm:$0xff]
  %v207 = vld [vmem:[%s5 + $0x30] sm:$0xff]
  %v208 = vld [vmem:[%s5 + $0x38] sm:$0xff]
  %v209 = vld [vmem:[%s3] sm:$0x1]
  %v211 = vlaneseq
  %v212 = vshrl.u32 %v211, 7
  %v213 = vsub.s32 0, %v212
  %v214 = vrot.slane %v209, %v213
  %v216 = vmul.f32 %v201, %v214
  %v217 = vmul.f32 %v202, %v214
  %v218 = vmul.f32 %v203, %v214
  %v219 = vmul.f32 %v204, %v214
  %v220 = vmul.f32 %v205, %v214
  %v221 = vmul.f32 %v206, %v214
  %v222 = vmul.f32 %v207, %v214
  %v223 = vmul.f32 %v208, %v214
  %v224 = vld [vmem:[%s6] sm:$0xff]
  %v225 = vld [vmem:[%s6 + $0x8] sm:$0xff]
  %v226 = vld [vmem:[%s6 + $0x10] sm:$0xff]
  %v227 = vld [vmem:[%s6 + $0x18] sm:$0xff]
  %v228 = vld [vmem:[%s6 + $0x20] sm:$0xff]
  %v229 = vld [vmem:[%s6 + $0x28] sm:$0xff]
  %v230 = vld [vmem:[%s6 + $0x30] sm:$0xff]
  %v231 = vld [vmem:[%s6 + $0x38] sm:$0xff]
  %v232 = vld [vmem:[%s4] sm:$0x1]
  %v234 = vlaneseq
  %v235 = vshrl.u32 %v234, 7
  %v236 = vsub.s32 0, %v235
  %v237 = vrot.slane %v232, %v236
  %v239 = vmul.f32 %v224, %v237
  %v240 = vmul.f32 %v225, %v237
  %v241 = vmul.f32 %v226, %v237
  %v242 = vmul.f32 %v227, %v237
  %v243 = vmul.f32 %v228, %v237
  %v244 = vmul.f32 %v229, %v237
  %v245 = vmul.f32 %v230, %v237
  %v246 = vmul.f32 %v231, %v237
  %v247 = vadd.f32 %v163, 0.0
  %v248 = vadd.f32 %v247, %v216
  %v249 = vadd.f32 %v248, 0.0
  %v250 = vadd.f32 %v249, %v239
  %vm251 = vcmp.ge.f32.partialorder %v250, 0.5
  %v252 = vsel %vm251, 1, 0
  %v253 = vcvt.s32.f32 %v252
  %v254 = vmul.f32 %v248, 0.5
  %v255 = vadd.f32 %v254, %v168
  %v256 = vadd.f32 %v255, %v217
  %v257 = vmul.f32 %v250, 0.75
  %v258 = vsub.f32 1.0, %v253
  %v259 = vmul.f32 %v257, %v258
  %v260 = vadd.f32 %v259, %v256
  %v261 = vadd.f32 %v260, %v240
  %vm262 = vcmp.ge.f32.partialorder %v261, 0.5
  %v263 = vsel %vm262, 1, 0
  %v264 = vcvt.s32.f32 %v263
  %v265 = vmul.f32 %v256, 0.5
  %v266 = vadd.f32 %v265, %v173
  %v267 = vadd.f32 %v266, %v218
  %v268 = vmul.f32 %v261, 0.75
  %v269 = vsub.f32 1.0, %v264
  %v270 = vmul.f32 %v268, %v269
  %v271 = vadd.f32 %v270, %v267
  %v272 = vadd.f32 %v271, %v241
  %vm273 = vcmp.ge.f32.partialorder %v272, 0.5
  %v274 = vsel %vm273, 1, 0
  %v275 = vcvt.s32.f32 %v274
  %v276 = vmul.f32 %v267, 0.5
  %v277 = vadd.f32 %v276, %v178
  %v278 = vadd.f32 %v277, %v219
  %v279 = vmul.f32 %v272, 0.75
  %v280 = vsub.f32 1.0, %v275
  %v281 = vmul.f32 %v279, %v280
  %v282 = vadd.f32 %v281, %v278
  %v283 = vadd.f32 %v282, %v242
  %vm284 = vcmp.ge.f32.partialorder %v283, 0.5
  %v285 = vsel %vm284, 1, 0
  %v286 = vcvt.s32.f32 %v285
  %v287 = vmul.f32 %v278, 0.5
  %v288 = vadd.f32 %v287, %v183
  %v289 = vadd.f32 %v288, %v220
  %v290 = vmul.f32 %v283, 0.75
  %v291 = vsub.f32 1.0, %v286
  %v292 = vmul.f32 %v290, %v291
  %v293 = vadd.f32 %v292, %v289
  %v294 = vadd.f32 %v293, %v243
  %vm295 = vcmp.ge.f32.partialorder %v294, 0.5
  %v296 = vsel %vm295, 1, 0
  %v297 = vcvt.s32.f32 %v296
  %v298 = vmul.f32 %v289, 0.5
  %v299 = vadd.f32 %v298, %v188
  %v300 = vadd.f32 %v299, %v221
  %v301 = vmul.f32 %v294, 0.75
  %v302 = vsub.f32 1.0, %v297
  %v303 = vmul.f32 %v301, %v302
  %v304 = vadd.f32 %v303, %v300
  %v305 = vadd.f32 %v304, %v244
  %vm306 = vcmp.ge.f32.partialorder %v305, 0.5
  %v307 = vsel %vm306, 1, 0
  %v308 = vcvt.s32.f32 %v307
  %v309 = vmul.f32 %v300, 0.5
  %v310 = vadd.f32 %v309, %v193
  %v311 = vadd.f32 %v310, %v222
  %v312 = vmul.f32 %v305, 0.75
  %v313 = vsub.f32 1.0, %v308
  %v314 = vmul.f32 %v312, %v313
  %v315 = vadd.f32 %v314, %v311
  %v316 = vadd.f32 %v315, %v245
  %vm317 = vcmp.ge.f32.partialorder %v316, 0.5
  %v318 = vsel %vm317, 1, 0
  %v319 = vcvt.s32.f32 %v318
  %v320 = vmul.f32 %v311, 0.5
  %v321 = vadd.f32 %v320, %v198
  %v322 = vadd.f32 %v321, %v223
  %v323 = vmul.f32 %v316, 0.75
  %v324 = vsub.f32 1.0, %v319
  %v325 = vmul.f32 %v323, %v324
  %v326 = vadd.f32 %v325, %v322
  %v327 = vadd.f32 %v326, %v246
  %vm328 = vcmp.ge.f32.partialorder %v327, 0.5
  %v329 = vsel %vm328, 1, 0
  %v330 = vcvt.s32.f32 %v329
  %v331 = vld [vmem:[%s7] sm:$0xff]
  %v332 = vld [vmem:[%s7 + $0x8] sm:$0xff]
  %v333 = vld [vmem:[%s7 + $0x10] sm:$0xff]
  %v334 = vld [vmem:[%s7 + $0x18] sm:$0xff]
  %v335 = vld [vmem:[%s7 + $0x20] sm:$0xff]
  %v336 = vld [vmem:[%s7 + $0x28] sm:$0xff]
  %v337 = vld [vmem:[%s7 + $0x30] sm:$0xff]
  %v338 = vld [vmem:[%s7 + $0x38] sm:$0xff]
  %v339 = vld [vmem:[%s7 + $0x40] sm:$0xff]
  %v340 = vld [vmem:[%s7 + $0x48] sm:$0xff]
  %v341 = vld [vmem:[%s7 + $0x50] sm:$0xff]
  %v342 = vld [vmem:[%s7 + $0x58] sm:$0xff]
  %v343 = vld [vmem:[%s7 + $0x60] sm:$0xff]
  %v344 = vld [vmem:[%s7 + $0x68] sm:$0xff]
  %v345 = vld [vmem:[%s7 + $0x70] sm:$0xff]
  %v346 = vld [vmem:[%s7 + $0x78] sm:$0xff]
  %v347 = vld [vmem:[%s8] sm:$0x1]
  %v349 = vlaneseq
  %v350 = vshrl.u32 %v349, 7
  %v351 = vsub.s32 0, %v350
  %v352 = vrot.slane %v347, %v351
  %354 = vmatprep.subr.mxu0 0.0
  %355 = vmatpush1.msra.mxu0 %v331
  %356 = vmatprep.subr.mxu0 0.0
  %357 = vmatpush1.msra.mxu0 %v332
  %358 = vmatprep.subr.mxu0 0.0
  %359 = vmatpush1.msra.mxu0 %v333
  %360 = vmatprep.subr.mxu0 0.0
  %361 = vmatpush1.msra.mxu0 %v334
  %362 = vmatprep.subr.mxu0 0.0
  %363 = vmatpush1.msra.mxu0 %v335
  %364 = vmatprep.subr.mxu0 0.0
  %365 = vmatpush1.msra.mxu0 %v336
  %366 = vmatprep.subr.mxu0 0.0
  %367 = vmatpush1.msra.mxu0 %v337
  %368 = vmatprep.subr.mxu0 0.0
  %369 = vmatpush1.msra.mxu0 %v338
  %370 = vmatprep.subr.mxu0 0.0
  %371 = vmatpush1.msra.mxu0 %v339
  %372 = vmatprep.subr.mxu0 0.0
  %373 = vmatpush1.msra.mxu0 %v340
  %374 = vmatprep.subr.mxu0 0.0
  %375 = vmatpush1.msra.mxu0 %v341
  %376 = vmatprep.subr.mxu0 0.0
  %377 = vmatpush1.msra.mxu0 %v342
  %378 = vmatprep.subr.mxu0 0.0
  %379 = vmatpush1.msra.mxu0 %v343
  %380 = vmatprep.subr.mxu0 0.0
  %381 = vmatpush1.msra.mxu0 %v344
  %382 = vmatprep.subr.mxu0 0.0
  %383 = vmatpush1.msra.mxu0 %v345
  %384 = vmatprep.subr.mxu0 0.0
  %385 = vmatpush1.msra.mxu0 %v346
  %386 = vmatprep.subr.mxu0 0.0
  %387 = vmatpush1.msra.mxu0 0.0
  %388 = vmatprep.subr.mxu0 0.0
  %389 = vmatpush1.msra.mxu0 0.0
  %390 = vmatprep.subr.mxu0 0.0
  %391 = vmatpush1.msra.mxu0 0.0
  %392 = vmatprep.subr.mxu0 0.0
  %393 = vmatpush1.msra.mxu0 0.0
  %394 = vmatprep.subr.mxu0 0.0
  %395 = vmatpush1.msra.mxu0 0.0
  %396 = vmatprep.subr.mxu0 0.0
  %397 = vmatpush1.msra.mxu0 0.0
  %398 = vmatprep.subr.mxu0 0.0
  %399 = vmatpush1.msra.mxu0 0.0
  %400 = vmatprep.subr.mxu0 0.0
  %401 = vmatpush1.msra.mxu0 0.0
  %402 = vmatprep.subr.mxu0 0.0
  %403 = vmatpush1.msra.mxu0 0.0
  %404 = vmatprep.subr.mxu0 0.0
  %405 = vmatpush1.msra.mxu0 0.0
  %406 = vmatprep.subr.mxu0 0.0
  %407 = vmatpush1.msra.mxu0 0.0
  %408 = vmatprep.subr.mxu0 0.0
  %409 = vmatpush1.msra.mxu0 0.0
  %410 = vmatprep.subr.mxu0 0.0
  %411 = vmatpush1.msra.mxu0 0.0
  %412 = vmatprep.subr.mxu0 0.0
  %413 = vmatpush1.msra.mxu0 0.0
  %414 = vmatprep.subr.mxu0 0.0
  %415 = vmatpush1.msra.mxu0 0.0
  %416 = vmatprep.subr.mxu0 0.0
  %417 = vmatpush1.msra.mxu0 0.0
  %418 = vmatprep.mubr.f32.mxu0 0.0
  %419 = vmatmul.mubr.f32.gmra.mrb[0].mxu0 %v253
  %v420 = vpop.f32.mrb[0].mxu0
  %v421 = vadd.f32 %v352, %v420
  %v422 = vpop.f32.mrb[0].mxu0
  %423 = vmatprep.mubr.f32.mxu0 0.0
  %424 = vmatmul.mubr.f32.gmra.mrb[0].mxu0 %v264
  %v425 = vpop.f32.mrb[0].mxu0
  %v426 = vadd.f32 %v352, %v425
  %v427 = vpop.f32.mrb[0].mxu0
  %428 = vmatprep.mubr.f32.mxu0 0.0
  %429 = vmatmul.mubr.f32.gmra.mrb[0].mxu0 %v275
  %v430 = vpop.f32.mrb[0].mxu0
  %v431 = vadd.f32 %v352, %v430
  %v432 = vpop.f32.mrb[0].mxu0
  %433 = vmatprep.mubr.f32.mxu0 0.0
  %434 = vmatmul.mubr.f32.gmra.mrb[0].mxu0 %v286
  %v435 = vpop.f32.mrb[0].mxu0
  %v436 = vadd.f32 %v352, %v435
  %v437 = vpop.f32.mrb[0].mxu0
  %438 = vmatprep.mubr.f32.mxu0 0.0
  %439 = vmatmul.mubr.f32.gmra.mrb[0].mxu0 %v297
  %v440 = vpop.f32.mrb[0].mxu0
  %v441 = vadd.f32 %v352, %v440
  %v442 = vpop.f32.mrb[0].mxu0
  %443 = vmatprep.mubr.f32.mxu0 0.0
  %444 = vmatmul.mubr.f32.gmra.mrb[0].mxu0 %v308
  %v445 = vpop.f32.mrb[0].mxu0
  %v446 = vadd.f32 %v352, %v445
  %v447 = vpop.f32.mrb[0].mxu0
  %448 = vmatprep.mubr.f32.mxu0 0.0
  %449 = vmatmul.mubr.f32.gmra.mrb[0].mxu0 %v319
  %v450 = vpop.f32.mrb[0].mxu0
  %v451 = vadd.f32 %v352, %v450
  %v452 = vpop.f32.mrb[0].mxu0
  %453 = vmatprep.mubr.f32.mxu0 0.0
  %454 = vmatmul.mubr.f32.gmra.mrb[0].mxu0 %v330
  %v455 = vpop.f32.mrb[0].mxu0
  %v456 = vadd.f32 %v352, %v455
  %v457 = vpop.f32.mrb[0].mxu0
  %458 = vdwg.mxu0
  %v459 = vld [vmem:[%s11] sm:$0xff]
  %v460 = vld [vmem:[%s11 + $0x8] sm:$0xff]
  %v461 = vld [vmem:[%s11 + $0x10] sm:$0xff]
  %v462 = vld [vmem:[%s11 + $0x18] sm:$0xff]
  %v463 = vld [vmem:[%s11 + $0x20] sm:$0xff]
  %v464 = vld [vmem:[%s11 + $0x28] sm:$0xff]
  %v465 = vld [vmem:[%s11 + $0x30] sm:$0xff]
  %v466 = vld [vmem:[%s11 + $0x38] sm:$0xff]
  %v467 = vld [vmem:[%s9] sm:$0x1]
  %v469 = vlaneseq
  %v470 = vshrl.u32 %v469, 7
  %v471 = vsub.s32 0, %v470
  %v472 = vrot.slane %v467, %v471
  %v474 = vmul.f32 %v459, %v472
  %v475 = vmul.f32 %v460, %v472
  %v476 = vmul.f32 %v461, %v472
  %v477 = vmul.f32 %v462, %v472
  %v478 = vmul.f32 %v463, %v472
  %v479 = vmul.f32 %v464, %v472
  %v480 = vmul.f32 %v465, %v472
  %v481 = vmul.f32 %v466, %v472
  %v482 = vld [vmem:[%s12] sm:$0xff]
  %v483 = vld [vmem:[%s12 + $0x8] sm:$0xff]
  %v484 = vld [vmem:[%s12 + $0x10] sm:$0xff]
  %v485 = vld [vmem:[%s12 + $0x18] sm:$0xff]
  %v486 = vld [vmem:[%s12 + $0x20] sm:$0xff]
  %v487 = vld [vmem:[%s12 + $0x28] sm:$0xff]
  %v488 = vld [vmem:[%s12 + $0x30] sm:$0xff]
  %v489 = vld [vmem:[%s12 + $0x38] sm:$0xff]
  %v490 = vld [vmem:[%s10] sm:$0x1]
  %v492 = vlaneseq
  %v493 = vshrl.u32 %v492, 7
  %v494 = vsub.s32 0, %v493
  %v495 = vrot.slane %v490, %v494
  %v497 = vmul.f32 %v482, %v495
  %v498 = vmul.f32 %v483, %v495
  %v499 = vmul.f32 %v484, %v495
  %v500 = vmul.f32 %v485, %v495
  %v501 = vmul.f32 %v486, %v495
  %v502 = vmul.f32 %v487, %v495
  %v503 = vmul.f32 %v488, %v495
  %v504 = vmul.f32 %v489, %v495
  %v505 = vadd.f32 %v421, 0.0
  %v506 = vadd.f32 %v505, %v474
  %v507 = vadd.f32 %v506, 0.0
  %v508 = vadd.f32 %v507, %v497
  %vm509 = vcmp.ge.f32.partialorder %v508, 0.5
  %v510 = vsel %vm509, 1, 0
  %v511 = vcvt.s32.f32 %v510
  %v512 = vmul.f32 %v506, 0.5
  %v513 = vadd.f32 %v512, %v426
  %v514 = vadd.f32 %v513, %v475
  %v515 = vmul.f32 %v508, 0.75
  %v516 = vsub.f32 1.0, %v511
  %v517 = vmul.f32 %v515, %v516
  %v518 = vadd.f32 %v517, %v514
  %v519 = vadd.f32 %v518, %v498
  %vm520 = vcmp.ge.f32.partialorder %v519, 0.5
  %v521 = vsel %vm520, 1, 0
  %v522 = vcvt.s32.f32 %v521
  %v523 = vmul.f32 %v514, 0.5
  %v524 = vadd.f32 %v523, %v431
  %v525 = vadd.f32 %v524, %v476
  %v526 = vmul.f32 %v519, 0.75
  %v527 = vsub.f32 1.0, %v522
  %v528 = vmul.f32 %v526, %v527
  %v529 = vadd.f32 %v528, %v525
  %v530 = vadd.f32 %v529, %v499
  %vm531 = vcmp.ge.f32.partialorder %v530, 0.5
  %v532 = vsel %vm531, 1, 0
  %v533 = vcvt.s32.f32 %v532
  %v534 = vmul.f32 %v525, 0.5
  %v535 = vadd.f32 %v534, %v436
  %v536 = vadd.f32 %v535, %v477
  %v537 = vmul.f32 %v530, 0.75
  %v538 = vsub.f32 1.0, %v533
  %v539 = vmul.f32 %v537, %v538
  %v540 = vadd.f32 %v539, %v536
  %v541 = vadd.f32 %v540, %v500
  %vm542 = vcmp.ge.f32.partialorder %v541, 0.5
  %v543 = vsel %vm542, 1, 0
  %v544 = vcvt.s32.f32 %v543
  %v545 = vmul.f32 %v536, 0.5
  %v546 = vadd.f32 %v545, %v441
  %v547 = vadd.f32 %v546, %v478
  %v548 = vmul.f32 %v541, 0.75
  %v549 = vsub.f32 1.0, %v544
  %v550 = vmul.f32 %v548, %v549
  %v551 = vadd.f32 %v550, %v547
  %v552 = vadd.f32 %v551, %v501
  %vm553 = vcmp.ge.f32.partialorder %v552, 0.5
  %v554 = vsel %vm553, 1, 0
  %v555 = vcvt.s32.f32 %v554
  %v556 = vmul.f32 %v547, 0.5
  %v557 = vadd.f32 %v556, %v446
  %v558 = vadd.f32 %v557, %v479
  %v559 = vmul.f32 %v552, 0.75
  %v560 = vsub.f32 1.0, %v555
  %v561 = vmul.f32 %v559, %v560
  %v562 = vadd.f32 %v561, %v558
  %v563 = vadd.f32 %v562, %v502
  %vm564 = vcmp.ge.f32.partialorder %v563, 0.5
  %v565 = vsel %vm564, 1, 0
  %v566 = vcvt.s32.f32 %v565
  %v567 = vmul.f32 %v558, 0.5
  %v568 = vadd.f32 %v567, %v451
  %v569 = vadd.f32 %v568, %v480
  %v570 = vmul.f32 %v563, 0.75
  %v571 = vsub.f32 1.0, %v566
  %v572 = vmul.f32 %v570, %v571
  %v573 = vadd.f32 %v572, %v569
  %v574 = vadd.f32 %v573, %v503
  %vm575 = vcmp.ge.f32.partialorder %v574, 0.5
  %v576 = vsel %vm575, 1, 0
  %v577 = vcvt.s32.f32 %v576
  %v578 = vmul.f32 %v569, 0.5
  %v579 = vadd.f32 %v578, %v456
  %v580 = vadd.f32 %v579, %v481
  %v581 = vmul.f32 %v574, 0.75
  %v582 = vsub.f32 1.0, %v577
  %v583 = vmul.f32 %v581, %v582
  %v584 = vadd.f32 %v583, %v580
  %v585 = vadd.f32 %v584, %v504
  %vm586 = vcmp.ge.f32.partialorder %v585, 0.5
  %v587 = vsel %vm586, 1, 0
  %v588 = vcvt.s32.f32 %v587
  %v589 = vld [vmem:[%s13] sm:$0xff]
  %v590 = vld [vmem:[%s13 + $0x8] sm:$0xff]
  %v591 = vld [vmem:[%s13 + $0x10] sm:$0xff]
  %v592 = vld [vmem:[%s13 + $0x18] sm:$0xff]
  %v593 = vld [vmem:[%s13 + $0x20] sm:$0xff]
  %v594 = vld [vmem:[%s13 + $0x28] sm:$0xff]
  %v595 = vld [vmem:[%s13 + $0x30] sm:$0xff]
  %v596 = vld [vmem:[%s13 + $0x38] sm:$0xff]
  %v597 = vld [vmem:[%s13 + $0x40] sm:$0xff]
  %v598 = vld [vmem:[%s13 + $0x48] sm:$0xff]
  %v599 = vld [vmem:[%s13 + $0x50] sm:$0xff]
  %v600 = vld [vmem:[%s13 + $0x58] sm:$0xff]
  %v601 = vld [vmem:[%s13 + $0x60] sm:$0xff]
  %v602 = vld [vmem:[%s13 + $0x68] sm:$0xff]
  %v603 = vld [vmem:[%s13 + $0x70] sm:$0xff]
  %v604 = vld [vmem:[%s13 + $0x78] sm:$0xff]
  %v605 = vld [vmem:[%s14] sm:$0x1]
  %v607 = vlaneseq
  %v608 = vshrl.u32 %v607, 7
  %v609 = vsub.s32 0, %v608
  %v610 = vrot.slane %v605, %v609
  %612 = vmatprep.subr.mxu0 0.0
  %613 = vmatpush1.msra.mxu0 %v589
  %614 = vmatprep.subr.mxu0 0.0
  %615 = vmatpush1.msra.mxu0 %v590
  %616 = vmatprep.subr.mxu0 0.0
  %617 = vmatpush1.msra.mxu0 %v591
  %618 = vmatprep.subr.mxu0 0.0
  %619 = vmatpush1.msra.mxu0 %v592
  %620 = vmatprep.subr.mxu0 0.0
  %621 = vmatpush1.msra.mxu0 %v593
  %622 = vmatprep.subr.mxu0 0.0
  %623 = vmatpush1.msra.mxu0 %v594
  %624 = vmatprep.subr.mxu0 0.0
  %625 = vmatpush1.msra.mxu0 %v595
  %626 = vmatprep.subr.mxu0 0.0
  %627 = vmatpush1.msra.mxu0 %v596
  %628 = vmatprep.subr.mxu0 0.0
  %629 = vmatpush1.msra.mxu0 %v597
  %630 = vmatprep.subr.mxu0 0.0
  %631 = vmatpush1.msra.mxu0 %v598
  %632 = vmatprep.subr.mxu0 0.0
  %633 = vmatpush1.msra.mxu0 %v599
  %634 = vmatprep.subr.mxu0 0.0
  %635 = vmatpush1.msra.mxu0 %v600
  %636 = vmatprep.subr.mxu0 0.0
  %637 = vmatpush1.msra.mxu0 %v601
  %638 = vmatprep.subr.mxu0 0.0
  %639 = vmatpush1.msra.mxu0 %v602
  %640 = vmatprep.subr.mxu0 0.0
  %641 = vmatpush1.msra.mxu0 %v603
  %642 = vmatprep.subr.mxu0 0.0
  %643 = vmatpush1.msra.mxu0 %v604
  %644 = vmatprep.subr.mxu0 0.0
  %645 = vmatpush1.msra.mxu0 0.0
  %646 = vmatprep.subr.mxu0 0.0
  %647 = vmatpush1.msra.mxu0 0.0
  %648 = vmatprep.subr.mxu0 0.0
  %649 = vmatpush1.msra.mxu0 0.0
  %650 = vmatprep.subr.mxu0 0.0
  %651 = vmatpush1.msra.mxu0 0.0
  %652 = vmatprep.subr.mxu0 0.0
  %653 = vmatpush1.msra.mxu0 0.0
  %654 = vmatprep.subr.mxu0 0.0
  %655 = vmatpush1.msra.mxu0 0.0
  %656 = vmatprep.subr.mxu0 0.0
  %657 = vmatpush1.msra.mxu0 0.0
  %658 = vmatprep.subr.mxu0 0.0
  %659 = vmatpush1.msra.mxu0 0.0
  %660 = vmatprep.subr.mxu0 0.0
  %661 = vmatpush1.msra.mxu0 0.0
  %662 = vmatprep.subr.mxu0 0.0
  %663 = vmatpush1.msra.mxu0 0.0
  %664 = vmatprep.subr.mxu0 0.0
  %665 = vmatpush1.msra.mxu0 0.0
  %666 = vmatprep.subr.mxu0 0.0
  %667 = vmatpush1.msra.mxu0 0.0
  %668 = vmatprep.subr.mxu0 0.0
  %669 = vmatpush1.msra.mxu0 0.0
  %670 = vmatprep.subr.mxu0 0.0
  %671 = vmatpush1.msra.mxu0 0.0
  %672 = vmatprep.subr.mxu0 0.0
  %673 = vmatpush1.msra.mxu0 0.0
  %674 = vmatprep.subr.mxu0 0.0
  %675 = vmatpush1.msra.mxu0 0.0
  %676 = vmatprep.mubr.f32.mxu0 0.0
  %677 = vmatmul.mubr.f32.gmra.mrb[0].mxu0 %v511
  %v678 = vpop.f32.mrb[0].mxu0
  %v679 = vadd.f32 %v610, %v678
  %v680 = vpop.f32.mrb[0].mxu0
  %681 = vmatprep.mubr.f32.mxu0 0.0
  %682 = vmatmul.mubr.f32.gmra.mrb[0].mxu0 %v522
  %v683 = vpop.f32.mrb[0].mxu0
  %v684 = vadd.f32 %v610, %v683
  %v685 = vpop.f32.mrb[0].mxu0
  %686 = vmatprep.mubr.f32.mxu0 0.0
  %687 = vmatmul.mubr.f32.gmra.mrb[0].mxu0 %v533
  %v688 = vpop.f32.mrb[0].mxu0
  %v689 = vadd.f32 %v610, %v688
  %v690 = vpop.f32.mrb[0].mxu0
  %691 = vmatprep.mubr.f32.mxu0 0.0
  %692 = vmatmul.mubr.f32.gmra.mrb[0].mxu0 %v544
  %v693 = vpop.f32.mrb[0].mxu0
  %v694 = vadd.f32 %v610, %v693
  %v695 = vpop.f32.mrb[0].mxu0
  %696 = vmatprep.mubr.f32.mxu0 0.0
  %697 = vmatmul.mubr.f32.gmra.mrb[0].mxu0 %v555
  %v698 = vpop.f32.mrb[0].mxu0
  %v699 = vadd.f32 %v610, %v698
  %v700 = vpop.f32.mrb[0].mxu0
  %701 = vmatprep.mubr.f32.mxu0 0.0
  %702 = vmatmul.mubr.f32.gmra.mrb[0].mxu0 %v566
  %v703 = vpop.f32.mrb[0].mxu0
  %v704 = vadd.f32 %v610, %v703
  %v705 = vpop.f32.mrb[0].mxu0
  %706 = vmatprep.mubr.f32.mxu0 0.0
  %707 = vmatmul.mubr.f32.gmra.mrb[0].mxu0 %v577
  %v708 = vpop.f32.mrb[0].mxu0
  %v709 = vadd.f32 %v610, %v708
  %v710 = vpop.f32.mrb[0].mxu0
  %711 = vmatprep.mubr.f32.mxu0 0.0
  %712 = vmatmul.mubr.f32.gmra.mrb[0].mxu0 %v588
  %v713 = vpop.f32.mrb[0].mxu0
  %v714 = vadd.f32 %v610, %v713
  %v715 = vpop.f32.mrb[0].mxu0
  %716 = vdwg.mxu0
  %v717 = vld [vmem:[%s17] sm:$0xff]
  %v718 = vld [vmem:[%s17 + $0x8] sm:$0xff]
  %v719 = vld [vmem:[%s17 + $0x10] sm:$0xff]
  %v720 = vld [vmem:[%s17 + $0x18] sm:$0xff]
  %v721 = vld [vmem:[%s17 + $0x20] sm:$0xff]
  %v722 = vld [vmem:[%s17 + $0x28] sm:$0xff]
  %v723 = vld [vmem:[%s17 + $0x30] sm:$0xff]
  %v724 = vld [vmem:[%s17 + $0x38] sm:$0xff]
  %v725 = vld [vmem:[%s15] sm:$0x1]
  %v727 = vlaneseq
  %v728 = vshrl.u32 %v727, 7
  %v729 = vsub.s32 0, %v728
  %v730 = vrot.slane %v725, %v729
  %v732 = vmul.f32 %v717, %v730
  %v733 = vmul.f32 %v718, %v730
  %v734 = vmul.f32 %v719, %v730
  %v735 = vmul.f32 %v720, %v730
  %v736 = vmul.f32 %v721, %v730
  %v737 = vmul.f32 %v722, %v730
  %v738 = vmul.f32 %v723, %v730
  %v739 = vmul.f32 %v724, %v730
  %v740 = vld [vmem:[%s18] sm:$0xff]
  %v741 = vld [vmem:[%s18 + $0x8] sm:$0xff]
  %v742 = vld [vmem:[%s18 + $0x10] sm:$0xff]
  %v743 = vld [vmem:[%s18 + $0x18] sm:$0xff]
  %v744 = vld [vmem:[%s18 + $0x20] sm:$0xff]
  %v745 = vld [vmem:[%s18 + $0x28] sm:$0xff]
  %v746 = vld [vmem:[%s18 + $0x30] sm:$0xff]
  %v747 = vld [vmem:[%s18 + $0x38] sm:$0xff]
  %v748 = vld [vmem:[%s16] sm:$0x1]
  %v750 = vlaneseq
  %v751 = vshrl.u32 %v750, 7
  %v752 = vsub.s32 0, %v751
  %v753 = vrot.slane %v748, %v752
  %v755 = vmul.f32 %v740, %v753
  %v756 = vmul.f32 %v741, %v753
  %v757 = vmul.f32 %v742, %v753
  %v758 = vmul.f32 %v743, %v753
  %v759 = vmul.f32 %v744, %v753
  %v760 = vmul.f32 %v745, %v753
  %v761 = vmul.f32 %v746, %v753
  %v762 = vmul.f32 %v747, %v753
  %v763 = vld [vmem:[%s19] sm:$0xff]
  %v764 = vld [vmem:[%s19 + $0x8] sm:$0xff]
  %v765 = vld [vmem:[%s19 + $0x10] sm:$0xff]
  %v766 = vld [vmem:[%s19 + $0x18] sm:$0xff]
  %v767 = vld [vmem:[%s19 + $0x20] sm:$0xff]
  %v768 = vld [vmem:[%s19 + $0x28] sm:$0xff]
  %v769 = vld [vmem:[%s19 + $0x30] sm:$0xff]
  %v770 = vld [vmem:[%s19 + $0x38] sm:$0xff]
  %v771 = vld [vmem:[%s19 + $0x40] sm:$0xff]
  %v772 = vld [vmem:[%s19 + $0x48] sm:$0xff]
  %v773 = vld [vmem:[%s19 + $0x50] sm:$0xff]
  %v774 = vld [vmem:[%s19 + $0x58] sm:$0xff]
  %v775 = vld [vmem:[%s19 + $0x60] sm:$0xff]
  %v776 = vld [vmem:[%s19 + $0x68] sm:$0xff]
  %v777 = vld [vmem:[%s19 + $0x70] sm:$0xff]
  %v778 = vld [vmem:[%s19 + $0x78] sm:$0xff]
  %779 = vmatprep.subr.mxu0 0.0
  %780 = vmatpush1.msra.mxu0 %v763
  %781 = vmatprep.subr.mxu0 0.0
  %782 = vmatpush1.msra.mxu0 %v764
  %783 = vmatprep.subr.mxu0 0.0
  %784 = vmatpush1.msra.mxu0 %v765
  %785 = vmatprep.subr.mxu0 0.0
  %786 = vmatpush1.msra.mxu0 %v766
  %787 = vmatprep.subr.mxu0 0.0
  %788 = vmatpush1.msra.mxu0 %v767
  %789 = vmatprep.subr.mxu0 0.0
  %790 = vmatpush1.msra.mxu0 %v768
  %791 = vmatprep.subr.mxu0 0.0
  %792 = vmatpush1.msra.mxu0 %v769
  %793 = vmatprep.subr.mxu0 0.0
  %794 = vmatpush1.msra.mxu0 %v770
  %795 = vmatprep.subr.mxu0 0.0
  %796 = vmatpush1.msra.mxu0 %v771
  %797 = vmatprep.subr.mxu0 0.0
  %798 = vmatpush1.msra.mxu0 %v772
  %799 = vmatprep.subr.mxu0 0.0
  %800 = vmatpush1.msra.mxu0 %v773
  %801 = vmatprep.subr.mxu0 0.0
  %802 = vmatpush1.msra.mxu0 %v774
  %803 = vmatprep.subr.mxu0 0.0
  %804 = vmatpush1.msra.mxu0 %v775
  %805 = vmatprep.subr.mxu0 0.0
  %806 = vmatpush1.msra.mxu0 %v776
  %807 = vmatprep.subr.mxu0 0.0
  %808 = vmatpush1.msra.mxu0 %v777
  %809 = vmatprep.subr.mxu0 0.0
  %810 = vmatpush1.msra.mxu0 %v778
  %811 = vmatprep.subr.mxu0 0.0
  %812 = vmatpush1.msra.mxu0 0.0
  %813 = vmatprep.subr.mxu0 0.0
  %814 = vmatpush1.msra.mxu0 0.0
  %815 = vmatprep.subr.mxu0 0.0
  %816 = vmatpush1.msra.mxu0 0.0
  %817 = vmatprep.subr.mxu0 0.0
  %818 = vmatpush1.msra.mxu0 0.0
  %819 = vmatprep.subr.mxu0 0.0
  %820 = vmatpush1.msra.mxu0 0.0
  %821 = vmatprep.subr.mxu0 0.0
  %822 = vmatpush1.msra.mxu0 0.0
  %823 = vmatprep.subr.mxu0 0.0
  %824 = vmatpush1.msra.mxu0 0.0
  %825 = vmatprep.subr.mxu0 0.0
  %826 = vmatpush1.msra.mxu0 0.0
  %827 = vmatprep.subr.mxu0 0.0
  %828 = vmatpush1.msra.mxu0 0.0
  %829 = vmatprep.subr.mxu0 0.0
  %830 = vmatpush1.msra.mxu0 0.0
  %831 = vmatprep.subr.mxu0 0.0
  %832 = vmatpush1.msra.mxu0 0.0
  %833 = vmatprep.subr.mxu0 0.0
  %834 = vmatpush1.msra.mxu0 0.0
  %835 = vmatprep.subr.mxu0 0.0
  %836 = vmatpush1.msra.mxu0 0.0
  %837 = vmatprep.subr.mxu0 0.0
  %838 = vmatpush1.msra.mxu0 0.0
  %839 = vmatprep.subr.mxu0 0.0
  %840 = vmatpush1.msra.mxu0 0.0
  %841 = vmatprep.subr.mxu0 0.0
  %842 = vmatpush1.msra.mxu0 0.0
  %843 = vmatprep.mubr.f32.mxu0 0.0
  %844 = vmatmul.mubr.f32.gmra.mrb[0].mxu0 0.0
  %v845 = vpop.f32.mrb[0].mxu0
  %v846 = vadd.f32 0.0, %v845
  %v847 = vpop.f32.mrb[0].mxu0
  %848 = vdwg.mxu0
  %v849 = vadd.f32 %v679, %v846
  %v850 = vadd.f32 %v849, 0.0
  %v851 = vadd.f32 %v850, %v732
  %v852 = vadd.f32 %v851, 0.0
  %v853 = vadd.f32 %v852, %v755
  %vm854 = vcmp.ge.f32.partialorder %v853, 0.5
  %v855 = vsel %vm854, 1, 0
  %v856 = vcvt.s32.f32 %v855
  %857 = vmatprep.subr.mxu0 0.0
  %858 = vmatpush1.msra.mxu0 %v763
  %859 = vmatprep.subr.mxu0 0.0
  %860 = vmatpush1.msra.mxu0 %v764
  %861 = vmatprep.subr.mxu0 0.0
  %862 = vmatpush1.msra.mxu0 %v765
  %863 = vmatprep.subr.mxu0 0.0
  %864 = vmatpush1.msra.mxu0 %v766
  %865 = vmatprep.subr.mxu0 0.0
  %866 = vmatpush1.msra.mxu0 %v767
  %867 = vmatprep.subr.mxu0 0.0
  %868 = vmatpush1.msra.mxu0 %v768
  %869 = vmatprep.subr.mxu0 0.0
  %870 = vmatpush1.msra.mxu0 %v769
  %871 = vmatprep.subr.mxu0 0.0
  %872 = vmatpush1.msra.mxu0 %v770
  %873 = vmatprep.subr.mxu0 0.0
  %874 = vmatpush1.msra.mxu0 %v771
  %875 = vmatprep.subr.mxu0 0.0
  %876 = vmatpush1.msra.mxu0 %v772
  %877 = vmatprep.subr.mxu0 0.0
  %878 = vmatpush1.msra.mxu0 %v773
  %879 = vmatprep.subr.mxu0 0.0
  %880 = vmatpush1.msra.mxu0 %v774
  %881 = vmatprep.subr.mxu0 0.0
  %882 = vmatpush1.msra.mxu0 %v775
  %883 = vmatprep.subr.mxu0 0.0
  %884 = vmatpush1.msra.mxu0 %v776
  %885 = vmatprep.subr.mxu0 0.0
  %886 = vmatpush1.msra.mxu0 %v777
  %887 = vmatprep.subr.mxu0 0.0
  %888 = vmatpush1.msra.mxu0 %v778
  %889 = vmatprep.subr.mxu0 0.0
  %890 = vmatpush1.msra.mxu0 0.0
  %891 = vmatprep.subr.mxu0 0.0
  %892 = vmatpush1.msra.mxu0 0.0
  %893 = vmatprep.subr.mxu0 0.0
  %894 = vmatpush1.msra.mxu0 0.0
  %895 = vmatprep.subr.mxu0 0.0
  %896 = vmatpush1.msra.mxu0 0.0
  %897 = vmatprep.subr.mxu0 0.0
  %898 = vmatpush1.msra.mxu0 0.0
  %899 = vmatprep.subr.mxu0 0.0
  %900 = vmatpush1.msra.mxu0 0.0
  %901 = vmatprep.subr.mxu0 0.0
  %902 = vmatpush1.msra.mxu0 0.0
  %903 = vmatprep.subr.mxu0 0.0
  %904 = vmatpush1.msra.mxu0 0.0
  %905 = vmatprep.subr.mxu0 0.0
  %906 = vmatpush1.msra.mxu0 0.0
  %907 = vmatprep.subr.mxu0 0.0
  %908 = vmatpush1.msra.mxu0 0.0
  %909 = vmatprep.subr.mxu0 0.0
  %910 = vmatpush1.msra.mxu0 0.0
  %911 = vmatprep.subr.mxu0 0.0
  %912 = vmatpush1.msra.mxu0 0.0
  %913 = vmatprep.subr.mxu0 0.0
  %914 = vmatpush1.msra.mxu0 0.0
  %915 = vmatprep.subr.mxu0 0.0
  %916 = vmatpush1.msra.mxu0 0.0
  %917 = vmatprep.subr.mxu0 0.0
  %918 = vmatpush1.msra.mxu0 0.0
  %919 = vmatprep.subr.mxu0 0.0
  %920 = vmatpush1.msra.mxu0 0.0
  %921 = vmatprep.mubr.f32.mxu0 0.0
  %922 = vmatmul.mubr.f32.gmra.mrb[0].mxu0 %v856
  %v923 = vpop.f32.mrb[0].mxu0
  %v924 = vadd.f32 0.0, %v923
  %v925 = vpop.f32.mrb[0].mxu0
  %926 = vdwg.mxu0
  %v927 = vadd.f32 %v684, %v924
  %v928 = vmul.f32 %v851, 0.5
  %v929 = vadd.f32 %v928, %v927
  %v930 = vadd.f32 %v929, %v733
  %v931 = vmul.f32 %v853, 0.75
  %v932 = vsub.f32 1.0, %v856
  %v933 = vmul.f32 %v931, %v932
  %v934 = vadd.f32 %v933, %v930
  %v935 = vadd.f32 %v934, %v756
  %vm936 = vcmp.ge.f32.partialorder %v935, 0.5
  %v937 = vsel %vm936, 1, 0
  %v938 = vcvt.s32.f32 %v937
  %939 = vmatprep.subr.mxu0 0.0
  %940 = vmatpush1.msra.mxu0 %v763
  %941 = vmatprep.subr.mxu0 0.0
  %942 = vmatpush1.msra.mxu0 %v764
  %943 = vmatprep.subr.mxu0 0.0
  %944 = vmatpush1.msra.mxu0 %v765
  %945 = vmatprep.subr.mxu0 0.0
  %946 = vmatpush1.msra.mxu0 %v766
  %947 = vmatprep.subr.mxu0 0.0
  %948 = vmatpush1.msra.mxu0 %v767
  %949 = vmatprep.subr.mxu0 0.0
  %950 = vmatpush1.msra.mxu0 %v768
  %951 = vmatprep.subr.mxu0 0.0
  %952 = vmatpush1.msra.mxu0 %v769
  %953 = vmatprep.subr.mxu0 0.0
  %954 = vmatpush1.msra.mxu0 %v770
  %955 = vmatprep.subr.mxu0 0.0
  %956 = vmatpush1.msra.mxu0 %v771
  %957 = vmatprep.subr.mxu0 0.0
  %958 = vmatpush1.msra.mxu0 %v772
  %959 = vmatprep.subr.mxu0 0.0
  %960 = vmatpush1.msra.mxu0 %v773
  %961 = vmatprep.subr.mxu0 0.0
  %962 = vmatpush1.msra.mxu0 %v774
  %963 = vmatprep.subr.mxu0 0.0
  %964 = vmatpush1.msra.mxu0 %v775
  %965 = vmatprep.subr.mxu0 0.0
  %966 = vmatpush1.msra.mxu0 %v776
  %967 = vmatprep.subr.mxu0 0.0
  %968 = vmatpush1.msra.mxu0 %v777
  %969 = vmatprep.subr.mxu0 0.0
  %970 = vmatpush1.msra.mxu0 %v778
  %971 = vmatprep.subr.mxu0 0.0
  %972 = vmatpush1.msra.mxu0 0.0
  %973 = vmatprep.subr.mxu0 0.0
  %974 = vmatpush1.msra.mxu0 0.0
  %975 = vmatprep.subr.mxu0 0.0
  %976 = vmatpush1.msra.mxu0 0.0
  %977 = vmatprep.subr.mxu0 0.0
  %978 = vmatpush1.msra.mxu0 0.0
  %979 = vmatprep.subr.mxu0 0.0
  %980 = vmatpush1.msra.mxu0 0.0
  %981 = vmatprep.subr.mxu0 0.0
  %982 = vmatpush1.msra.mxu0 0.0
  %983 = vmatprep.subr.mxu0 0.0
  %984 = vmatpush1.msra.mxu0 0.0
  %985 = vmatprep.subr.mxu0 0.0
  %986 = vmatpush1.msra.mxu0 0.0
  %987 = vmatprep.subr.mxu0 0.0
  %988 = vmatpush1.msra.mxu0 0.0
  %989 = vmatprep.subr.mxu0 0.0
  %990 = vmatpush1.msra.mxu0 0.0
  %991 = vmatprep.subr.mxu0 0.0
  %992 = vmatpush1.msra.mxu0 0.0
  %993 = vmatprep.subr.mxu0 0.0
  %994 = vmatpush1.msra.mxu0 0.0
  %995 = vmatprep.subr.mxu0 0.0
  %996 = vmatpush1.msra.mxu0 0.0
  %997 = vmatprep.subr.mxu0 0.0
  %998 = vmatpush1.msra.mxu0 0.0
  %999 = vmatprep.subr.mxu0 0.0
  %1000 = vmatpush1.msra.mxu0 0.0
  %1001 = vmatprep.subr.mxu0 0.0
  %1002 = vmatpush1.msra.mxu0 0.0
  %1003 = vmatprep.mubr.f32.mxu0 0.0
  %1004 = vmatmul.mubr.f32.gmra.mrb[0].mxu0 %v938
  %v1005 = vpop.f32.mrb[0].mxu0
  %v1006 = vadd.f32 0.0, %v1005
  %v1007 = vpop.f32.mrb[0].mxu0
  %1008 = vdwg.mxu0
  %v1009 = vadd.f32 %v689, %v1006
  %v1010 = vmul.f32 %v930, 0.5
  %v1011 = vadd.f32 %v1010, %v1009
  %v1012 = vadd.f32 %v1011, %v734
  %v1013 = vmul.f32 %v935, 0.75
  %v1014 = vsub.f32 1.0, %v938
  %v1015 = vmul.f32 %v1013, %v1014
  %v1016 = vadd.f32 %v1015, %v1012
  %v1017 = vadd.f32 %v1016, %v757
  %vm1018 = vcmp.ge.f32.partialorder %v1017, 0.5
  %v1019 = vsel %vm1018, 1, 0
  %v1020 = vcvt.s32.f32 %v1019
  %1021 = vmatprep.subr.mxu0 0.0
  %1022 = vmatpush1.msra.mxu0 %v763
  %1023 = vmatprep.subr.mxu0 0.0
  %1024 = vmatpush1.msra.mxu0 %v764
  %1025 = vmatprep.subr.mxu0 0.0
  %1026 = vmatpush1.msra.mxu0 %v765
  %1027 = vmatprep.subr.mxu0 0.0
  %1028 = vmatpush1.msra.mxu0 %v766
  %1029 = vmatprep.subr.mxu0 0.0
  %1030 = vmatpush1.msra.mxu0 %v767
  %1031 = vmatprep.subr.mxu0 0.0
  %1032 = vmatpush1.msra.mxu0 %v768
  %1033 = vmatprep.subr.mxu0 0.0
  %1034 = vmatpush1.msra.mxu0 %v769
  %1035 = vmatprep.subr.mxu0 0.0
  %1036 = vmatpush1.msra.mxu0 %v770
  %1037 = vmatprep.subr.mxu0 0.0
  %1038 = vmatpush1.msra.mxu0 %v771
  %1039 = vmatprep.subr.mxu0 0.0
  %1040 = vmatpush1.msra.mxu0 %v772
  %1041 = vmatprep.subr.mxu0 0.0
  %1042 = vmatpush1.msra.mxu0 %v773
  %1043 = vmatprep.subr.mxu0 0.0
  %1044 = vmatpush1.msra.mxu0 %v774
  %1045 = vmatprep.subr.mxu0 0.0
  %1046 = vmatpush1.msra.mxu0 %v775
  %1047 = vmatprep.subr.mxu0 0.0
  %1048 = vmatpush1.msra.mxu0 %v776
  %1049 = vmatprep.subr.mxu0 0.0
  %1050 = vmatpush1.msra.mxu0 %v777
  %1051 = vmatprep.subr.mxu0 0.0
  %1052 = vmatpush1.msra.mxu0 %v778
  %1053 = vmatprep.subr.mxu0 0.0
  %1054 = vmatpush1.msra.mxu0 0.0
  %1055 = vmatprep.subr.mxu0 0.0
  %1056 = vmatpush1.msra.mxu0 0.0
  %1057 = vmatprep.subr.mxu0 0.0
  %1058 = vmatpush1.msra.mxu0 0.0
  %1059 = vmatprep.subr.mxu0 0.0
  %1060 = vmatpush1.msra.mxu0 0.0
  %1061 = vmatprep.subr.mxu0 0.0
  %1062 = vmatpush1.msra.mxu0 0.0
  %1063 = vmatprep.subr.mxu0 0.0
  %1064 = vmatpush1.msra.mxu0 0.0
  %1065 = vmatprep.subr.mxu0 0.0
  %1066 = vmatpush1.msra.mxu0 0.0
  %1067 = vmatprep.subr.mxu0 0.0
  %1068 = vmatpush1.msra.mxu0 0.0
  %1069 = vmatprep.subr.mxu0 0.0
  %1070 = vmatpush1.msra.mxu0 0.0
  %1071 = vmatprep.subr.mxu0 0.0
  %1072 = vmatpush1.msra.mxu0 0.0
  %1073 = vmatprep.subr.mxu0 0.0
  %1074 = vmatpush1.msra.mxu0 0.0
  %1075 = vmatprep.subr.mxu0 0.0
  %1076 = vmatpush1.msra.mxu0 0.0
  %1077 = vmatprep.subr.mxu0 0.0
  %1078 = vmatpush1.msra.mxu0 0.0
  %1079 = vmatprep.subr.mxu0 0.0
  %1080 = vmatpush1.msra.mxu0 0.0
  %1081 = vmatprep.subr.mxu0 0.0
  %1082 = vmatpush1.msra.mxu0 0.0
  %1083 = vmatprep.subr.mxu0 0.0
  %1084 = vmatpush1.msra.mxu0 0.0
  %1085 = vmatprep.mubr.f32.mxu0 0.0
  %1086 = vmatmul.mubr.f32.gmra.mrb[0].mxu0 %v1020
  %v1087 = vpop.f32.mrb[0].mxu0
  %v1088 = vadd.f32 0.0, %v1087
  %v1089 = vpop.f32.mrb[0].mxu0
  %1090 = vdwg.mxu0
  %v1091 = vadd.f32 %v694, %v1088
  %v1092 = vmul.f32 %v1012, 0.5
  %v1093 = vadd.f32 %v1092, %v1091
  %v1094 = vadd.f32 %v1093, %v735
  %v1095 = vmul.f32 %v1017, 0.75
  %v1096 = vsub.f32 1.0, %v1020
  %v1097 = vmul.f32 %v1095, %v1096
  %v1098 = vadd.f32 %v1097, %v1094
  %v1099 = vadd.f32 %v1098, %v758
  %vm1100 = vcmp.ge.f32.partialorder %v1099, 0.5
  %v1101 = vsel %vm1100, 1, 0
  %v1102 = vcvt.s32.f32 %v1101
  %1103 = vmatprep.subr.mxu0 0.0
  %1104 = vmatpush1.msra.mxu0 %v763
  %1105 = vmatprep.subr.mxu0 0.0
  %1106 = vmatpush1.msra.mxu0 %v764
  %1107 = vmatprep.subr.mxu0 0.0
  %1108 = vmatpush1.msra.mxu0 %v765
  %1109 = vmatprep.subr.mxu0 0.0
  %1110 = vmatpush1.msra.mxu0 %v766
  %1111 = vmatprep.subr.mxu0 0.0
  %1112 = vmatpush1.msra.mxu0 %v767
  %1113 = vmatprep.subr.mxu0 0.0
  %1114 = vmatpush1.msra.mxu0 %v768
  %1115 = vmatprep.subr.mxu0 0.0
  %1116 = vmatpush1.msra.mxu0 %v769
  %1117 = vmatprep.subr.mxu0 0.0
  %1118 = vmatpush1.msra.mxu0 %v770
  %1119 = vmatprep.subr.mxu0 0.0
  %1120 = vmatpush1.msra.mxu0 %v771
  %1121 = vmatprep.subr.mxu0 0.0
  %1122 = vmatpush1.msra.mxu0 %v772
  %1123 = vmatprep.subr.mxu0 0.0
  %1124 = vmatpush1.msra.mxu0 %v773
  %1125 = vmatprep.subr.mxu0 0.0
  %1126 = vmatpush1.msra.mxu0 %v774
  %1127 = vmatprep.subr.mxu0 0.0
  %1128 = vmatpush1.msra.mxu0 %v775
  %1129 = vmatprep.subr.mxu0 0.0
  %1130 = vmatpush1.msra.mxu0 %v776
  %1131 = vmatprep.subr.mxu0 0.0
  %1132 = vmatpush1.msra.mxu0 %v777
  %1133 = vmatprep.subr.mxu0 0.0
  %1134 = vmatpush1.msra.mxu0 %v778
  %1135 = vmatprep.subr.mxu0 0.0
  %1136 = vmatpush1.msra.mxu0 0.0
  %1137 = vmatprep.subr.mxu0 0.0
  %1138 = vmatpush1.msra.mxu0 0.0
  %1139 = vmatprep.subr.mxu0 0.0
  %1140 = vmatpush1.msra.mxu0 0.0
  %1141 = vmatprep.subr.mxu0 0.0
  %1142 = vmatpush1.msra.mxu0 0.0
  %1143 = vmatprep.subr.mxu0 0.0
  %1144 = vmatpush1.msra.mxu0 0.0
  %1145 = vmatprep.subr.mxu0 0.0
  %1146 = vmatpush1.msra.mxu0 0.0
  %1147 = vmatprep.subr.mxu0 0.0
  %1148 = vmatpush1.msra.mxu0 0.0
  %1149 = vmatprep.subr.mxu0 0.0
  %1150 = vmatpush1.msra.mxu0 0.0
  %1151 = vmatprep.subr.mxu0 0.0
  %1152 = vmatpush1.msra.mxu0 0.0
  %1153 = vmatprep.subr.mxu0 0.0
  %1154 = vmatpush1.msra.mxu0 0.0
  %1155 = vmatprep.subr.mxu0 0.0
  %1156 = vmatpush1.msra.mxu0 0.0
  %1157 = vmatprep.subr.mxu0 0.0
  %1158 = vmatpush1.msra.mxu0 0.0
  %1159 = vmatprep.subr.mxu0 0.0
  %1160 = vmatpush1.msra.mxu0 0.0
  %1161 = vmatprep.subr.mxu0 0.0
  %1162 = vmatpush1.msra.mxu0 0.0
  %1163 = vmatprep.subr.mxu0 0.0
  %1164 = vmatpush1.msra.mxu0 0.0
  %1165 = vmatprep.subr.mxu0 0.0
  %1166 = vmatpush1.msra.mxu0 0.0
  %1167 = vmatprep.mubr.f32.mxu0 0.0
  %1168 = vmatmul.mubr.f32.gmra.mrb[0].mxu0 %v1102
  %v1169 = vpop.f32.mrb[0].mxu0
  %v1170 = vadd.f32 0.0, %v1169
  %v1171 = vpop.f32.mrb[0].mxu0
  %1172 = vdwg.mxu0
  %v1173 = vadd.f32 %v699, %v1170
  %v1174 = vmul.f32 %v1094, 0.5
  %v1175 = vadd.f32 %v1174, %v1173
  %v1176 = vadd.f32 %v1175, %v736
  %v1177 = vmul.f32 %v1099, 0.75
  %v1178 = vsub.f32 1.0, %v1102
  %v1179 = vmul.f32 %v1177, %v1178
  %v1180 = vadd.f32 %v1179, %v1176
  %v1181 = vadd.f32 %v1180, %v759
  %vm1182 = vcmp.ge.f32.partialorder %v1181, 0.5
  %v1183 = vsel %vm1182, 1, 0
  %v1184 = vcvt.s32.f32 %v1183
  %1185 = vmatprep.subr.mxu0 0.0
  %1186 = vmatpush1.msra.mxu0 %v763
  %1187 = vmatprep.subr.mxu0 0.0
  %1188 = vmatpush1.msra.mxu0 %v764
  %1189 = vmatprep.subr.mxu0 0.0
  %1190 = vmatpush1.msra.mxu0 %v765
  %1191 = vmatprep.subr.mxu0 0.0
  %1192 = vmatpush1.msra.mxu0 %v766
  %1193 = vmatprep.subr.mxu0 0.0
  %1194 = vmatpush1.msra.mxu0 %v767
  %1195 = vmatprep.subr.mxu0 0.0
  %1196 = vmatpush1.msra.mxu0 %v768
  %1197 = vmatprep.subr.mxu0 0.0
  %1198 = vmatpush1.msra.mxu0 %v769
  %1199 = vmatprep.subr.mxu0 0.0
  %1200 = vmatpush1.msra.mxu0 %v770
  %1201 = vmatprep.subr.mxu0 0.0
  %1202 = vmatpush1.msra.mxu0 %v771
  %1203 = vmatprep.subr.mxu0 0.0
  %1204 = vmatpush1.msra.mxu0 %v772
  %1205 = vmatprep.subr.mxu0 0.0
  %1206 = vmatpush1.msra.mxu0 %v773
  %1207 = vmatprep.subr.mxu0 0.0
  %1208 = vmatpush1.msra.mxu0 %v774
  %1209 = vmatprep.subr.mxu0 0.0
  %1210 = vmatpush1.msra.mxu0 %v775
  %1211 = vmatprep.subr.mxu0 0.0
  %1212 = vmatpush1.msra.mxu0 %v776
  %1213 = vmatprep.subr.mxu0 0.0
  %1214 = vmatpush1.msra.mxu0 %v777
  %1215 = vmatprep.subr.mxu0 0.0
  %1216 = vmatpush1.msra.mxu0 %v778
  %1217 = vmatprep.subr.mxu0 0.0
  %1218 = vmatpush1.msra.mxu0 0.0
  %1219 = vmatprep.subr.mxu0 0.0
  %1220 = vmatpush1.msra.mxu0 0.0
  %1221 = vmatprep.subr.mxu0 0.0
  %1222 = vmatpush1.msra.mxu0 0.0
  %1223 = vmatprep.subr.mxu0 0.0
  %1224 = vmatpush1.msra.mxu0 0.0
  %1225 = vmatprep.subr.mxu0 0.0
  %1226 = vmatpush1.msra.mxu0 0.0
  %1227 = vmatprep.subr.mxu0 0.0
  %1228 = vmatpush1.msra.mxu0 0.0
  %1229 = vmatprep.subr.mxu0 0.0
  %1230 = vmatpush1.msra.mxu0 0.0
  %1231 = vmatprep.subr.mxu0 0.0
  %1232 = vmatpush1.msra.mxu0 0.0
  %1233 = vmatprep.subr.mxu0 0.0
  %1234 = vmatpush1.msra.mxu0 0.0
  %1235 = vmatprep.subr.mxu0 0.0
  %1236 = vmatpush1.msra.mxu0 0.0
  %1237 = vmatprep.subr.mxu0 0.0
  %1238 = vmatpush1.msra.mxu0 0.0
  %1239 = vmatprep.subr.mxu0 0.0
  %1240 = vmatpush1.msra.mxu0 0.0
  %1241 = vmatprep.subr.mxu0 0.0
  %1242 = vmatpush1.msra.mxu0 0.0
  %1243 = vmatprep.subr.mxu0 0.0
  %1244 = vmatpush1.msra.mxu0 0.0
  %1245 = vmatprep.subr.mxu0 0.0
  %1246 = vmatpush1.msra.mxu0 0.0
  %1247 = vmatprep.subr.mxu0 0.0
  %1248 = vmatpush1.msra.mxu0 0.0
  %1249 = vmatprep.mubr.f32.mxu0 0.0
  %1250 = vmatmul.mubr.f32.gmra.mrb[0].mxu0 %v1184
  %v1251 = vpop.f32.mrb[0].mxu0
  %v1252 = vadd.f32 0.0, %v1251
  %v1253 = vpop.f32.mrb[0].mxu0
  %1254 = vdwg.mxu0
  %v1255 = vadd.f32 %v704, %v1252
  %v1256 = vmul.f32 %v1176, 0.5
  %v1257 = vadd.f32 %v1256, %v1255
  %v1258 = vadd.f32 %v1257, %v737
  %v1259 = vmul.f32 %v1181, 0.75
  %v1260 = vsub.f32 1.0, %v1184
  %v1261 = vmul.f32 %v1259, %v1260
  %v1262 = vadd.f32 %v1261, %v1258
  %v1263 = vadd.f32 %v1262, %v760
  %vm1264 = vcmp.ge.f32.partialorder %v1263, 0.5
  %v1265 = vsel %vm1264, 1, 0
  %v1266 = vcvt.s32.f32 %v1265
  %1267 = vmatprep.subr.mxu0 0.0
  %1268 = vmatpush1.msra.mxu0 %v763
  %1269 = vmatprep.subr.mxu0 0.0
  %1270 = vmatpush1.msra.mxu0 %v764
  %1271 = vmatprep.subr.mxu0 0.0
  %1272 = vmatpush1.msra.mxu0 %v765
  %1273 = vmatprep.subr.mxu0 0.0
  %1274 = vmatpush1.msra.mxu0 %v766
  %1275 = vmatprep.subr.mxu0 0.0
  %1276 = vmatpush1.msra.mxu0 %v767
  %1277 = vmatprep.subr.mxu0 0.0
  %1278 = vmatpush1.msra.mxu0 %v768
  %1279 = vmatprep.subr.mxu0 0.0
  %1280 = vmatpush1.msra.mxu0 %v769
  %1281 = vmatprep.subr.mxu0 0.0
  %1282 = vmatpush1.msra.mxu0 %v770
  %1283 = vmatprep.subr.mxu0 0.0
  %1284 = vmatpush1.msra.mxu0 %v771
  %1285 = vmatprep.subr.mxu0 0.0
  %1286 = vmatpush1.msra.mxu0 %v772
  %1287 = vmatprep.subr.mxu0 0.0
  %1288 = vmatpush1.msra.mxu0 %v773
  %1289 = vmatprep.subr.mxu0 0.0
  %1290 = vmatpush1.msra.mxu0 %v774
  %1291 = vmatprep.subr.mxu0 0.0
  %1292 = vmatpush1.msra.mxu0 %v775
  %1293 = vmatprep.subr.mxu0 0.0
  %1294 = vmatpush1.msra.mxu0 %v776
  %1295 = vmatprep.subr.mxu0 0.0
  %1296 = vmatpush1.msra.mxu0 %v777
  %1297 = vmatprep.subr.mxu0 0.0
  %1298 = vmatpush1.msra.mxu0 %v778
  %1299 = vmatprep.subr.mxu0 0.0
  %1300 = vmatpush1.msra.mxu0 0.0
  %1301 = vmatprep.subr.mxu0 0.0
  %1302 = vmatpush1.msra.mxu0 0.0
  %1303 = vmatprep.subr.mxu0 0.0
  %1304 = vmatpush1.msra.mxu0 0.0
  %1305 = vmatprep.subr.mxu0 0.0
  %1306 = vmatpush1.msra.mxu0 0.0
  %1307 = vmatprep.subr.mxu0 0.0
  %1308 = vmatpush1.msra.mxu0 0.0
  %1309 = vmatprep.subr.mxu0 0.0
  %1310 = vmatpush1.msra.mxu0 0.0
  %1311 = vmatprep.subr.mxu0 0.0
  %1312 = vmatpush1.msra.mxu0 0.0
  %1313 = vmatprep.subr.mxu0 0.0
  %1314 = vmatpush1.msra.mxu0 0.0
  %1315 = vmatprep.subr.mxu0 0.0
  %1316 = vmatpush1.msra.mxu0 0.0
  %1317 = vmatprep.subr.mxu0 0.0
  %1318 = vmatpush1.msra.mxu0 0.0
  %1319 = vmatprep.subr.mxu0 0.0
  %1320 = vmatpush1.msra.mxu0 0.0
  %1321 = vmatprep.subr.mxu0 0.0
  %1322 = vmatpush1.msra.mxu0 0.0
  %1323 = vmatprep.subr.mxu0 0.0
  %1324 = vmatpush1.msra.mxu0 0.0
  %1325 = vmatprep.subr.mxu0 0.0
  %1326 = vmatpush1.msra.mxu0 0.0
  %1327 = vmatprep.subr.mxu0 0.0
  %1328 = vmatpush1.msra.mxu0 0.0
  %1329 = vmatprep.subr.mxu0 0.0
  %1330 = vmatpush1.msra.mxu0 0.0
  %1331 = vmatprep.mubr.f32.mxu0 0.0
  %1332 = vmatmul.mubr.f32.gmra.mrb[0].mxu0 %v1266
  %v1333 = vpop.f32.mrb[0].mxu0
  %v1334 = vadd.f32 0.0, %v1333
  %v1335 = vpop.f32.mrb[0].mxu0
  %1336 = vdwg.mxu0
  %v1337 = vadd.f32 %v709, %v1334
  %v1338 = vmul.f32 %v1258, 0.5
  %v1339 = vadd.f32 %v1338, %v1337
  %v1340 = vadd.f32 %v1339, %v738
  %v1341 = vmul.f32 %v1263, 0.75
  %v1342 = vsub.f32 1.0, %v1266
  %v1343 = vmul.f32 %v1341, %v1342
  %v1344 = vadd.f32 %v1343, %v1340
  %v1345 = vadd.f32 %v1344, %v761
  %vm1346 = vcmp.ge.f32.partialorder %v1345, 0.5
  %v1347 = vsel %vm1346, 1, 0
  %v1348 = vcvt.s32.f32 %v1347
  %1349 = vmatprep.subr.mxu0 0.0
  %1350 = vmatpush1.msra.mxu0 %v763
  %1351 = vmatprep.subr.mxu0 0.0
  %1352 = vmatpush1.msra.mxu0 %v764
  %1353 = vmatprep.subr.mxu0 0.0
  %1354 = vmatpush1.msra.mxu0 %v765
  %1355 = vmatprep.subr.mxu0 0.0
  %1356 = vmatpush1.msra.mxu0 %v766
  %1357 = vmatprep.subr.mxu0 0.0
  %1358 = vmatpush1.msra.mxu0 %v767
  %1359 = vmatprep.subr.mxu0 0.0
  %1360 = vmatpush1.msra.mxu0 %v768
  %1361 = vmatprep.subr.mxu0 0.0
  %1362 = vmatpush1.msra.mxu0 %v769
  %1363 = vmatprep.subr.mxu0 0.0
  %1364 = vmatpush1.msra.mxu0 %v770
  %1365 = vmatprep.subr.mxu0 0.0
  %1366 = vmatpush1.msra.mxu0 %v771
  %1367 = vmatprep.subr.mxu0 0.0
  %1368 = vmatpush1.msra.mxu0 %v772
  %1369 = vmatprep.subr.mxu0 0.0
  %1370 = vmatpush1.msra.mxu0 %v773
  %1371 = vmatprep.subr.mxu0 0.0
  %1372 = vmatpush1.msra.mxu0 %v774
  %1373 = vmatprep.subr.mxu0 0.0
  %1374 = vmatpush1.msra.mxu0 %v775
  %1375 = vmatprep.subr.mxu0 0.0
  %1376 = vmatpush1.msra.mxu0 %v776
  %1377 = vmatprep.subr.mxu0 0.0
  %1378 = vmatpush1.msra.mxu0 %v777
  %1379 = vmatprep.subr.mxu0 0.0
  %1380 = vmatpush1.msra.mxu0 %v778
  %1381 = vmatprep.subr.mxu0 0.0
  %1382 = vmatpush1.msra.mxu0 0.0
  %1383 = vmatprep.subr.mxu0 0.0
  %1384 = vmatpush1.msra.mxu0 0.0
  %1385 = vmatprep.subr.mxu0 0.0
  %1386 = vmatpush1.msra.mxu0 0.0
  %1387 = vmatprep.subr.mxu0 0.0
  %1388 = vmatpush1.msra.mxu0 0.0
  %1389 = vmatprep.subr.mxu0 0.0
  %1390 = vmatpush1.msra.mxu0 0.0
  %1391 = vmatprep.subr.mxu0 0.0
  %1392 = vmatpush1.msra.mxu0 0.0
  %1393 = vmatprep.subr.mxu0 0.0
  %1394 = vmatpush1.msra.mxu0 0.0
  %1395 = vmatprep.subr.mxu0 0.0
  %1396 = vmatpush1.msra.mxu0 0.0
  %1397 = vmatprep.subr.mxu0 0.0
  %1398 = vmatpush1.msra.mxu0 0.0
  %1399 = vmatprep.subr.mxu0 0.0
  %1400 = vmatpush1.msra.mxu0 0.0
  %1401 = vmatprep.subr.mxu0 0.0
  %1402 = vmatpush1.msra.mxu0 0.0
  %1403 = vmatprep.subr.mxu0 0.0
  %1404 = vmatpush1.msra.mxu0 0.0
  %1405 = vmatprep.subr.mxu0 0.0
  %1406 = vmatpush1.msra.mxu0 0.0
  %1407 = vmatprep.subr.mxu0 0.0
  %1408 = vmatpush1.msra.mxu0 0.0
  %1409 = vmatprep.subr.mxu0 0.0
  %1410 = vmatpush1.msra.mxu0 0.0
  %1411 = vmatprep.subr.mxu0 0.0
  %1412 = vmatpush1.msra.mxu0 0.0
  %1413 = vmatprep.mubr.f32.mxu0 0.0
  %1414 = vmatmul.mubr.f32.gmra.mrb[0].mxu0 %v1348
  %v1415 = vpop.f32.mrb[0].mxu0
  %v1416 = vadd.f32 0.0, %v1415
  %v1417 = vpop.f32.mrb[0].mxu0
  %1418 = vdwg.mxu0
  %v1419 = vadd.f32 %v714, %v1416
  %v1420 = vmul.f32 %v1340, 0.5
  %v1421 = vadd.f32 %v1420, %v1419
  %v1422 = vadd.f32 %v1421, %v739
  %v1423 = vmul.f32 %v1345, 0.75
  %v1424 = vsub.f32 1.0, %v1348
  %v1425 = vmul.f32 %v1423, %v1424
  %v1426 = vadd.f32 %v1425, %v1422
  %v1427 = vadd.f32 %v1426, %v762
  %vm1428 = vcmp.ge.f32.partialorder %v1427, 0.5
  %v1429 = vsel %vm1428, 1, 0
  %v1430 = vcvt.s32.f32 %v1429
  %1431 = vst [vmem:[%s20] sm:$0xff] %v856
  %1432 = vst [vmem:[%s20 + $0x8] sm:$0xff] %v938
  %1433 = vst [vmem:[%s20 + $0x10] sm:$0xff] %v1020
  %1434 = vst [vmem:[%s20 + $0x18] sm:$0xff] %v1102
  %1435 = vst [vmem:[%s20 + $0x20] sm:$0xff] %v1184
  %1436 = vst [vmem:[%s20 + $0x28] sm:$0xff] %v1266
  %1437 = vst [vmem:[%s20 + $0x30] sm:$0xff] %v1348
  %1438 = vst [vmem:[%s20 + $0x38] sm:$0xff] %v1430
  // Predicated region
  $region82: #{noisy_spike_mlp_forward.1} parent=0 // pred_check
    _
  $region83: #{noisy_spike_mlp_forward.1} parent=0 // pred_check_branch
    %1440 = sbr.rel (0) target = $region85
  $region84: #{noisy_spike_mlp_forward.1} parent=0 // pred_region
    _
  $region85: #{noisy_spike_mlp_forward.1} parent=0 // pred_fallthru
    _
  // Predicated region
  $region86: #{noisy_spike_mlp_forward.1} parent=0 // pred_check
    _
  $region87: #{noisy_spike_mlp_forward.1} parent=0 // pred_check_branch
    %1442 = sbr.rel (0) target = $region89
  $region88: #{noisy_spike_mlp_forward.1} parent=0 // pred_region
    _
  $region89: #{noisy_spike_mlp_forward.1} parent=0 // pred_fallthru
    _

</llo_original>
